<compile_context>
chip_gen: v5e
topology: v5e:2x2
jax: 0.10.0
libtpu: 0.0.40
codegen_flags: <defaults>
</compile_context>

<pallas_src>
import functools
import math

import jax
import jax.numpy as jnp
from jax import lax
from jax.experimental import pallas as pl
from jax.experimental.pallas import tpu as pltpu


def _pick_tile(n, pref):
    """Largest tile <= pref that divides n (falls back to n itself).
    TODO(synk): pad/mask instead of falling back to the full dim for large
    non-divisible n."""
    for t in (pref, 1024, 512, 256, 128, 64, 32, 16, 8):
        if t <= pref and t <= n and n % t == 0:
            return t
    return n


def _vmem_limit_bytes():
    """Generation-aware VMEM limit with ~25% headroom."""
    cap = 128 * 1024 * 1024
    try:
        info = pltpu.get_tpu_info()
        cap = int(getattr(info, "vmem_capacity_bytes", cap))
    except Exception:
        pass
    return int(min(cap - cap // 4, 100 * 1024 * 1024))


# --------------------------------------------------------------------------
# Kernel 1: fused QKV projection -> head-major q/k/v  (one (TS, C) tile / step)
# --------------------------------------------------------------------------
def _qkv_proj_kernel(x_ref, w_ref, b_ref, q_ref, k_ref, v_ref, *,
                     heads, dim_head):
    hidden = heads * dim_head
    x = x_ref[0]                                              # (TS, C) bf16
    qkv = jnp.dot(x, w_ref[...],
                  preferred_element_type=jnp.float32)         # (TS, 3*hidden) f32
    qkv = (qkv + b_ref[...]).astype(jnp.bfloat16)             # bias f32, store bf16
    # Write head-major so kernel 2 never lane-slices inside its hot K loop.
    for h in range(heads):
        lo = h * dim_head
        q_ref[0, h] = qkv[:, lo:lo + dim_head]
        k_ref[0, h] = qkv[:, hidden + lo:hidden + lo + dim_head]
        v_ref[0, h] = qkv[:, 2 * hidden + lo:2 * hidden + lo + dim_head]


# --------------------------------------------------------------------------
# Kernel 2: flash attention (online softmax over K tiles) + out proj + residual
# --------------------------------------------------------------------------
def _flash_attn_out_kernel(q_ref, k_ref, v_ref, xres_ref, wo_ref, bo_ref, o_ref,
                           *, heads, dim_head, k_tile):
    tq = q_ref.shape[2]
    s_len = k_ref.shape[2]
    n_k = s_len // k_tile
    unroll = bool(n_k <= 8)   # short fixed loop -> give the scheduler visibility

    ctx_parts = []
    for h in range(heads):
        qh = q_ref[0, h]                                      # (TQ, dh) bf16, pre-scaled

        def k_step(kt, carry, h=h, qh=qh):
            m_i, l_i, acc = carry
            start = pl.multiple_of(kt * k_tile, k_tile)
            kh = k_ref[0, h, pl.ds(start, k_tile), :]         # (TK, dh) bf16, row slice
            vh = v_ref[0, h, pl.ds(start, k_tile), :]         # (TK, dh) bf16
            # q @ k^T without materializing a transpose: contract last dims.
            s = lax.dot_general(qh, kh, (((1,), (1,)), ((), ())),
                                preferred_element_type=jnp.float32)   # (TQ, TK)
            m_new = jnp.maximum(m_i, jnp.max(s, axis=-1, keepdims=True))
            alpha = jnp.exp(m_i - m_new)
            p = jnp.exp(s - m_new)
            l_new = alpha * l_i + jnp.sum(p, axis=-1, keepdims=True)
            acc_new = alpha * acc + jnp.dot(p.astype(jnp.bfloat16), vh,
                                            preferred_element_type=jnp.float32)
            return m_new, l_new, acc_new

        m0 = jnp.full((tq, 1), -jnp.inf, jnp.float32)
        l0 = jnp.zeros((tq, 1), jnp.float32)
        a0 = jnp.zeros((tq, dim_head), jnp.float32)
        _, l_i, acc = lax.fori_loop(0, n_k, k_step, (m0, l0, a0), unroll=unroll)

        ctx_parts.append((acc * pl.reciprocal(l_i, approx=True)).astype(jnp.bfloat16))

    # One hidden-wide output projection per q-tile (full MXU feed, no per-head
    # read-modify-write of the (TQ, C) output).
    ctx = ctx_parts[0] if heads == 1 else jnp.concatenate(ctx_parts, axis=-1)
    out = jnp.dot(ctx, wo_ref[...], preferred_element_type=jnp.float32)   # (TQ, C)
    o_ref[0] = (out + bo_ref[...] + xres_ref[0]).astype(o_ref.dtype)


# --------------------------------------------------------------------------
# Wrapper
# --------------------------------------------------------------------------
def linear_self_attention(x_nchw, w_qkv, b_qkv, w_out, b_out, *,
                          heads, dim_head, q_tile=128, k_tile=128, s_tile=512):
    """x_nchw: (B, C, H, W).  Weights in matmul form (i.e. torch weight.T):
       w_qkv: (C, 3*heads*dim_head), b_qkv: (3*heads*dim_head,),
       w_out: (heads*dim_head, C),   b_out: (C,).   Returns (B, C, H, W)."""
    B, C, H, W = x_nchw.shape
    S = H * W
    hidden = heads * dim_head
    assert w_qkv.shape == (C, 3 * hidden)
    assert w_out.shape == (hidden, C)

    # NCHW -> (B, S, C).  bf16 feed for the QKV matmul, f32 copy for the residual.
    x_tok = jnp.transpose(x_nchw, (0, 2, 3, 1)).reshape(B, S, C)
    x_res = x_tok.astype(jnp.float32)
    x_bf = x_tok.astype(jnp.bfloat16)

    # Fold 1/sqrt(dim_head) into the Q columns of the QKV weight/bias (free).
    scale = 1.0 / math.sqrt(dim_head)
    col_scale = jnp.concatenate([jnp.full((hidden,), scale, jnp.float32),
                                 jnp.ones((2 * hidden,), jnp.float32)])
    w_qkv_bf = (w_qkv.astype(jnp.float32) * col_scale[None, :]).astype(jnp.bfloat16)
    b_qkv2 = (b_qkv.astype(jnp.float32) * col_scale).reshape(1, 3 * hidden)
    w_out_bf = w_out.astype(jnp.bfloat16)
    b_out2 = b_out.reshape(1, C).astype(jnp.float32)

    ts = _pick_tile(S, s_tile)
    tq = _pick_tile(S, q_tile)
    tk = _pick_tile(S, k_tile)

    cparams = pltpu.CompilerParams(
        dimension_semantics=("parallel", "parallel"),
        vmem_limit_bytes=_vmem_limit_bytes())

    # ---- Kernel 1: fused QKV projection (head-major outputs) ----
    k1 = functools.partial(_qkv_proj_kernel, heads=heads, dim_head=dim_head)
    q_hm, k_hm, v_hm = pl.pallas_call(
        k1,
        out_shape=[jax.ShapeDtypeStruct((B, heads, S, dim_head), jnp.bfloat16)] * 3,
        grid_spec=pltpu.PrefetchScalarGridSpec(
            num_scalar_prefetch=0,
            grid=(B, S // ts),
            in_specs=[
                pl.BlockSpec((1, ts, C), lambda b, s: (b, s, 0)),        # x tile (bf16)
                pl.BlockSpec((C, 3 * hidden), lambda b, s: (0, 0)),      # fused Wqkv
                pl.BlockSpec((1, 3 * hidden), lambda b, s: (0, 0)),      # bqkv (f32)
            ],
            out_specs=[pl.BlockSpec((1, heads, ts, dim_head),
                                    lambda b, s: (b, 0, s, 0))] * 3,
        ),
        compiler_params=cparams,
    )(x_bf, w_qkv_bf, b_qkv2)

    # ---- Kernel 2: flash attention + output projection + bias + residual ----
    k2 = functools.partial(_flash_attn_out_kernel,
                           heads=heads, dim_head=dim_head, k_tile=tk)
    out = pl.pallas_call(
        k2,
        out_shape=jax.ShapeDtypeStruct((B, S, C), jnp.float32),
        grid_spec=pltpu.PrefetchScalarGridSpec(
            num_scalar_prefetch=0,
            grid=(B, S // tq),
            in_specs=[
                pl.BlockSpec((1, heads, tq, dim_head), lambda b, qi: (b, 0, qi, 0)),
                pl.BlockSpec((1, heads, S, dim_head), lambda b, qi: (b, 0, 0, 0)),  # K resident
                pl.BlockSpec((1, heads, S, dim_head), lambda b, qi: (b, 0, 0, 0)),  # V resident
                pl.BlockSpec((1, tq, C), lambda b, qi: (b, qi, 0)),                 # residual x
                pl.BlockSpec((hidden, C), lambda b, qi: (0, 0)),                    # Wo
                pl.BlockSpec((1, C), lambda b, qi: (0, 0)),                         # bo
            ],
            out_specs=pl.BlockSpec((1, tq, C), lambda b, qi: (b, qi, 0)),
        ),
        compiler_params=cparams,
    )(q_hm, k_hm, v_hm, x_res, w_out_bf, b_out2)

    # (B, S, C) -> NCHW
    return jnp.transpose(out.reshape(B, H, W, C), (0, 3, 1, 2))


# --------------------------------------------------------------------------
# Pure-JAX reference (f32) for correctness check
# --------------------------------------------------------------------------
def _reference(x_nchw, w_qkv, b_qkv, w_out, b_out, *, heads, dim_head):
    B, C, H, W = x_nchw.shape
    S = H * W
    hidden = heads * dim_head
    xt = jnp.transpose(x_nchw, (0, 2, 3, 1)).reshape(B, S, C)
    qkv = xt @ w_qkv + b_qkv
    q, k, v = jnp.split(qkv, 3, axis=-1)
    q = q.reshape(B, S, heads, dim_head)
    k = k.reshape(B, S, heads, dim_head)
    v = v.reshape(B, S, heads, dim_head)
    s = jnp.einsum('bqhd,bkhd->bhqk', q, k) / math.sqrt(dim_head)
    p = jax.nn.softmax(s, axis=-1)
    o = jnp.einsum('bhqk,bkhd->bqhd', p, v).reshape(B, S, hidden)
    o = o @ w_out + b_out + xt
    return jnp.transpose(o.reshape(B, H, W, C), (0, 3, 1, 2))


if __name__ == "__main__":
    # Small shapes consistent with the module (dim=C, hidden = heads*dim_head != C).
    B, C, H, W = 2, 32, 16, 16         # S = 256
    heads, dim_head = 2, 32            # hidden = 64
    hidden = heads * dim_head

    key = jax.random.PRNGKey(0)
    kx, k1, k2, k3, k4 = jax.random.split(key, 5)
    x = jax.random.normal(kx, (B, C, H, W), jnp.float32)
    w_qkv = jax.random.normal(k1, (C, 3 * hidden), jnp.float32) * 0.1
    b_qkv = jax.random.normal(k2, (3 * hidden,), jnp.float32) * 0.05
    w_out = jax.random.normal(k3, (hidden, C), jnp.float32) * 0.1
    b_out = jax.random.normal(k4, (C,), jnp.float32) * 0.05

    # Defaults: q_tile=128, k_tile=128 -> online-softmax K loop runs 2 iterations
    # at S=256 and the (128,128) f32 score tile stays well under the vreg file.
    out = linear_self_attention(x, w_qkv, b_qkv, w_out, b_out,
                                heads=heads, dim_head=dim_head)
    out = jax.block_until_ready(out)

    ref = _reference(x, w_qkv, b_qkv, w_out, b_out, heads=heads, dim_head=dim_head)
    assert out.shape == (B, C, H, W), out.shape
    # bf16 MXU inputs with f32 accumulation -> ~1e-3..1e-2 deviation vs f32 reference.
    err = float(jnp.max(jnp.abs(out - ref)))
    assert err < 5e-2, err
    print("KERNEL_OK")
</pallas_src>

<mosaic_0001>
module attributes {stable_mosaic.version = 11 : i64} {
  func.func @_qkv_proj_kernel(%arg0: i32, %arg1: i32, %arg2: memref<1x256x32xbf16, #tpu.memory_space<vmem>>, %arg3: memref<32x192xbf16, #tpu.memory_space<vmem>>, %arg4: memref<1x192xf32, #tpu.memory_space<vmem>>, %arg5: memref<1x2x256x32xbf16, #tpu.memory_space<vmem>>, %arg6: memref<1x2x256x32xbf16, #tpu.memory_space<vmem>>, %arg7: memref<1x2x256x32xbf16, #tpu.memory_space<vmem>>) attributes {dimension_semantics = [#tpu.dimension_semantics<parallel>, #tpu.dimension_semantics<parallel>], iteration_bounds = array<i64: 2, 1>, scalar_prefetch = 0 : i64, scratch_operands = 0 : i64, tpu.core_type = #tpu.core_type<tc>, window_params = [{transform_indices = @transform_0, window_bounds = array<i64: 1, 256, 32>}, {pipeline_mode = #tpu.pipeline_mode<synchronous>, transform_indices = @transform_1, window_bounds = array<i64: 32, 192>}, {pipeline_mode = #tpu.pipeline_mode<synchronous>, transform_indices = @transform_2, window_bounds = array<i64: 1, 192>}, {transform_indices = @transform_3, window_bounds = array<i64: 1, 2, 256, 32>}, {transform_indices = @transform_4, window_bounds = array<i64: 1, 2, 256, 32>}, {transform_indices = @transform_5, window_bounds = array<i64: 1, 2, 256, 32>}]} {
    %c0 = arith.constant 0 : index
    %c0_0 = arith.constant 0 : index
    %c0_1 = arith.constant 0 : index
    %0 = vector.load %arg2[%c0, %c0_0, %c0_1] : memref<1x256x32xbf16, #tpu.memory_space<vmem>>, vector<1x256x32xbf16>
    %1 = vector.shape_cast %0 : vector<1x256x32xbf16> to vector<256x32xbf16>
    %c0_2 = arith.constant 0 : index
    %c0_3 = arith.constant 0 : index
    %2 = vector.load %arg3[%c0_2, %c0_3] : memref<32x192xbf16, #tpu.memory_space<vmem>>, vector<32x192xbf16>
    %cst = arith.constant dense<0.000000e+00> : vector<256x192xf32>
    %3 = tpu.matmul %1, %2, %cst {dimension_numbers = #tpu.dot_dimension_numbers<[1], [0], [0], [1], [0, 0, 1, 1], [], []>} : vector<256x32xbf16>, vector<32x192xbf16>, vector<256x192xf32> -> vector<256x192xf32>
    %c0_4 = arith.constant 0 : index
    %c0_5 = arith.constant 0 : index
    %4 = vector.load %arg4[%c0_4, %c0_5] : memref<1x192xf32, #tpu.memory_space<vmem>>, vector<1x192xf32>
    %5 = vector.broadcast %4 : vector<1x192xf32> to vector<256x192xf32>
    %6 = arith.addf %3, %5 : vector<256x192xf32>
    %7 = arith.truncf %6 : vector<256x192xf32> to vector<256x192xbf16>
    %8 = vector.extract_strided_slice %7 {offsets = [0, 0], sizes = [256, 32], strides = [1, 1]} : vector<256x192xbf16> to vector<256x32xbf16>
    %c0_6 = arith.constant 0 : index
    %c0_7 = arith.constant 0 : index
    %c0_8 = arith.constant 0 : index
    %c0_9 = arith.constant 0 : index
    %9 = vector.load %arg5[%c0_6, %c0_7, %c0_8, %c0_9] : memref<1x2x256x32xbf16, #tpu.memory_space<vmem>>, vector<1x1x256x32xbf16>
    %10 = vector.shape_cast %9 : vector<1x1x256x32xbf16> to vector<256x32xbf16>
    %11 = vector.shape_cast %8 : vector<256x32xbf16> to vector<1x1x256x32xbf16>
    tpu.vector_store %arg5[%c0_6, %c0_7, %c0_8, %c0_9], %11 {strides = array<i32>} : memref<1x2x256x32xbf16, #tpu.memory_space<vmem>>, vector<1x1x256x32xbf16>,
    %12 = vector.extract_strided_slice %7 {offsets = [0, 64], sizes = [256, 32], strides = [1, 1]} : vector<256x192xbf16> to vector<256x32xbf16>
    %c0_10 = arith.constant 0 : index
    %c0_11 = arith.constant 0 : index
    %c0_12 = arith.constant 0 : index
    %c0_13 = arith.constant 0 : index
    %13 = vector.load %arg6[%c0_10, %c0_11, %c0_12, %c0_13] : memref<1x2x256x32xbf16, #tpu.memory_space<vmem>>, vector<1x1x256x32xbf16>
    %14 = vector.shape_cast %13 : vector<1x1x256x32xbf16> to vector<256x32xbf16>
    %15 = vector.shape_cast %12 : vector<256x32xbf16> to vector<1x1x256x32xbf16>
    tpu.vector_store %arg6[%c0_10, %c0_11, %c0_12, %c0_13], %15 {strides = array<i32>} : memref<1x2x256x32xbf16, #tpu.memory_space<vmem>>, vector<1x1x256x32xbf16>,
    %16 = vector.extract_strided_slice %7 {offsets = [0, 128], sizes = [256, 32], strides = [1, 1]} : vector<256x192xbf16> to vector<256x32xbf16>
    %c0_14 = arith.constant 0 : index
    %c0_15 = arith.constant 0 : index
    %c0_16 = arith.constant 0 : index
    %c0_17 = arith.constant 0 : index
    %17 = vector.load %arg7[%c0_14, %c0_15, %c0_16, %c0_17] : memref<1x2x256x32xbf16, #tpu.memory_space<vmem>>, vector<1x1x256x32xbf16>
    %18 = vector.shape_cast %17 : vector<1x1x256x32xbf16> to vector<256x32xbf16>
    %19 = vector.shape_cast %16 : vector<256x32xbf16> to vector<1x1x256x32xbf16>
    tpu.vector_store %arg7[%c0_14, %c0_15, %c0_16, %c0_17], %19 {strides = array<i32>} : memref<1x2x256x32xbf16, #tpu.memory_space<vmem>>, vector<1x1x256x32xbf16>,
    %20 = vector.extract_strided_slice %7 {offsets = [0, 32], sizes = [256, 32], strides = [1, 1]} : vector<256x192xbf16> to vector<256x32xbf16>
    %c0_18 = arith.constant 0 : index
    %c1 = arith.constant 1 : index
    %c0_19 = arith.constant 0 : index
    %c0_20 = arith.constant 0 : index
    %21 = vector.load %arg5[%c0_18, %c1, %c0_19, %c0_20] : memref<1x2x256x32xbf16, #tpu.memory_space<vmem>>, vector<1x1x256x32xbf16>
    %22 = vector.shape_cast %21 : vector<1x1x256x32xbf16> to vector<256x32xbf16>
    %23 = vector.shape_cast %20 : vector<256x32xbf16> to vector<1x1x256x32xbf16>
    tpu.vector_store %arg5[%c0_18, %c1, %c0_19, %c0_20], %23 {strides = array<i32>} : memref<1x2x256x32xbf16, #tpu.memory_space<vmem>>, vector<1x1x256x32xbf16>,
    %24 = vector.extract_strided_slice %7 {offsets = [0, 96], sizes = [256, 32], strides = [1, 1]} : vector<256x192xbf16> to vector<256x32xbf16>
    %c0_21 = arith.constant 0 : index
    %c1_22 = arith.constant 1 : index
    %c0_23 = arith.constant 0 : index
    %c0_24 = arith.constant 0 : index
    %25 = vector.load %arg6[%c0_21, %c1_22, %c0_23, %c0_24] : memref<1x2x256x32xbf16, #tpu.memory_space<vmem>>, vector<1x1x256x32xbf16>
    %26 = vector.shape_cast %25 : vector<1x1x256x32xbf16> to vector<256x32xbf16>
    %27 = vector.shape_cast %24 : vector<256x32xbf16> to vector<1x1x256x32xbf16>
    tpu.vector_store %arg6[%c0_21, %c1_22, %c0_23, %c0_24], %27 {strides = array<i32>} : memref<1x2x256x32xbf16, #tpu.memory_space<vmem>>, vector<1x1x256x32xbf16>,
    %28 = vector.extract_strided_slice %7 {offsets = [0, 160], sizes = [256, 32], strides = [1, 1]} : vector<256x192xbf16> to vector<256x32xbf16>
    %c0_25 = arith.constant 0 : index
    %c1_26 = arith.constant 1 : index
    %c0_27 = arith.constant 0 : index
    %c0_28 = arith.constant 0 : index
    %29 = vector.load %arg7[%c0_25, %c1_26, %c0_27, %c0_28] : memref<1x2x256x32xbf16, #tpu.memory_space<vmem>>, vector<1x1x256x32xbf16>
    %30 = vector.shape_cast %29 : vector<1x1x256x32xbf16> to vector<256x32xbf16>
    %31 = vector.shape_cast %28 : vector<256x32xbf16> to vector<1x1x256x32xbf16>
    tpu.vector_store %arg7[%c0_25, %c1_26, %c0_27, %c0_28], %31 {strides = array<i32>} : memref<1x2x256x32xbf16, #tpu.memory_space<vmem>>, vector<1x1x256x32xbf16>,
    return
  }
  func.func @transform_0(%arg0: i32, %arg1: i32) -> (i32, i32, i32) {
    %c0_i32 = arith.constant 0 : i32
    %c0_i32_0 = arith.constant 0 : i32
    return %arg0, %arg1, %c0_i32 : i32, i32, i32
  }
  func.func @transform_1(%arg0: i32, %arg1: i32) -> (i32, i32) {
    %c0_i32 = arith.constant 0 : i32
    %c0_i32_0 = arith.constant 0 : i32
    %c0_i32_1 = arith.constant 0 : i32
    return %c0_i32, %c0_i32_0 : i32, i32
  }
  func.func @transform_2(%arg0: i32, %arg1: i32) -> (i32, i32) {
    %c0_i32 = arith.constant 0 : i32
    %c0_i32_0 = arith.constant 0 : i32
    %c0_i32_1 = arith.constant 0 : i32
    return %c0_i32, %c0_i32_0 : i32, i32
  }
  func.func @transform_3(%arg0: i32, %arg1: i32) -> (i32, i32, i32, i32) {
    %c0_i32 = arith.constant 0 : i32
    %c0_i32_0 = arith.constant 0 : i32
    %c0_i32_1 = arith.constant 0 : i32
    return %arg0, %c0_i32, %arg1, %c0_i32_0 : i32, i32, i32, i32
  }
  func.func @transform_4(%arg0: i32, %arg1: i32) -> (i32, i32, i32, i32) {
    %c0_i32 = arith.constant 0 : i32
    %c0_i32_0 = arith.constant 0 : i32
    %c0_i32_1 = arith.constant 0 : i32
    return %arg0, %c0_i32, %arg1, %c0_i32_0 : i32, i32, i32, i32
  }
  func.func @transform_5(%arg0: i32, %arg1: i32) -> (i32, i32, i32, i32) {
    %c0_i32 = arith.constant 0 : i32
    %c0_i32_0 = arith.constant 0 : i32
    %c0_i32_1 = arith.constant 0 : i32
    return %arg0, %c0_i32, %arg1, %c0_i32_0 : i32, i32, i32, i32
  }
}

</mosaic_0001>

<llo_original>
// kernel: tpu_custom_call.1
$region0: #{tpu_custom_call.1}
  #allocation0 [shape = 'u32[]', space=smem, size = 0x4, offset = 0x4, fixed_abs, tag = 'smem constant byte address 0x4 - core index']
  #allocation1 [shape = 'u32[72,128]{1,0:T(1,128)}', space=vmem, size = 0x9000, scoped, tag = 'internal scratch']
  %s0 = inlined_call_operand.vmem [shape: bf16[2,256,32], index: 0, kind: input, shape index: {}]
  %s1 = inlined_call_operand.vmem [shape: bf16[32,192], index: 1, kind: input, shape index: {}]
  %s2 = inlined_call_operand.vmem [shape: f32[1,192], index: 2, kind: input, shape index: {}]
  %s3 = inlined_call_operand.vmem [shape: bf16[2,2,256,32], index: 3, kind: output, shape index: {0}]
  %s4 = inlined_call_operand.vmem [shape: bf16[2,2,256,32], index: 4, kind: output, shape index: {1}]
  %s5 = inlined_call_operand.vmem [shape: bf16[2,2,256,32], index: 5, kind: output, shape index: {2}]
  %6 = xla_tuple %s3, %s4, %s5
  %s7 = sld [smem:[#allocation0]]
  $region61: #{tpu_custom_call.1} parent=0
    _
  %s9 = ssub.s32 1, %s7
  %s10 = scalar_select 0, %s9, %s7
  loop: start=0, step=1, limit=4
  $region2: #{tpu_custom_call.1} parent=0 // loop_pre_header
    _
  $region3: #{tpu_custom_call.1} parent=0 // loop_header
    %s12 = sphi 0, %s16
    %p13 = scmp.ge.s32.totalorder %s12, 4
    %s19 = sphi 0, %s31
    %s20 = sphi 0, %s27
    %s21 = sphi 0, %s19
    %s22 = sphi 0, %s20
    %s23 = sphi 0, %s21
    %s24 = sphi 0, %s22
    %s36 = sphi 0, %s38
    %s39 = sphi 0, %s36
    %s40 = sphi 0, %s39
    %s56 = sphi 0, %s40
    %s60 = sphi 0, %s60
    %s62 = sphi 0, %s60
    %s63 = sphi 0, %s62
    %s77 = sphi 0, %s63
    %s81 = sphi 0, %s81
    %s83 = sphi 0, %s81
    %s84 = sphi 0, %s83
    %s98 = sphi 0, %s84
    %s106 = sphi 0, %s108
    %s109 = sphi 0, %s106
    %s110 = sphi 0, %s109
    %s126 = sphi 0, %s110
    %s134 = sphi 0, %s136
    %s137 = sphi 0, %s134
    %s138 = sphi 0, %s137
    %s154 = sphi 0, %s138
    %s162 = sphi 0, %s164
    %s165 = sphi 0, %s162
    %s166 = sphi 0, %s165
    %s182 = sphi 0, %s166
  $region4: #{tpu_custom_call.1} parent=0 // loop_header_branch
    %15 = sbr.rel (%p13) target = $region8
  $region5: #{tpu_custom_call.1} parent=0 // loop_body
    %s17 = ssub.s32 %s12, 1
    %s18 = ssub.s32 %s12, 2
    %s25 = sadd.s32 1, %s20
    %p26 = scmp.ge.s32.totalorder %s25, 1
    %s27 = scalar_select %p26, 0, %s25
    %s28 = sadd.s32 1, %s19
    %s29 = scalar_select %p26, %s28, %s19
    %p30 = scmp.ge.s32.totalorder %s29, 2
    %s31 = scalar_select %p30, 0, %s29
    %s32 = ssub.s32 %s19, %s31
    %s33 = ssub.s32 %s20, %s27
    %s34 = sor.u32 %s32, %s33
    %p35 = scmp.eq.s32.totalorder %s34, 0
    %s37 = sadd.s32 %s36, 1
    %s38 = scalar_select %p35, %s36, %s37
    %p41 = pneg %p35
    %p42 = scmp.eq.s32.totalorder %s12, 1
    %p43 = por %p41, %p42
    %p44 = scmp.ne.s32.totalorder %s36, %s39
    %p45 = scmp.eq.s32.totalorder %s12, 0
    %p46 = por %p44, %p45
    %p47 = scmp.ne.s32.totalorder %s36, %s39
    %p48 = scmp.eq.s32.totalorder %s17, 1
    %p49 = por %p47, %p48
    %p50 = scmp.ne.s32.totalorder %s39, %s40
    %p51 = scmp.eq.s32.totalorder %s17, 0
    %p52 = por %p50, %p51
    %p53 = scmp.ne.s32.totalorder %s39, %s40
    %p54 = scmp.eq.s32.totalorder %s18, 1
    %p55 = por %p53, %p54
    %p57 = scmp.ne.s32.totalorder %s40, %s56
    %p58 = scmp.eq.s32.totalorder %s18, 0
    %p59 = por %p57, %p58
    %s61 = sadd.s32 %s60, 1
    %p64 = scmp.eq.s32.totalorder %s12, 1
    %p65 = scmp.ne.s32.totalorder %s60, %s62
    %p66 = scmp.eq.s32.totalorder %s12, 0
    %p67 = por %p65, %p66
    %p68 = scmp.ne.s32.totalorder %s60, %s62
    %p69 = scmp.eq.s32.totalorder %s17, 1
    %p70 = por %p68, %p69
    %p71 = scmp.ne.s32.totalorder %s62, %s63
    %p72 = scmp.eq.s32.totalorder %s17, 0
    %p73 = por %p71, %p72
    %p74 = scmp.ne.s32.totalorder %s62, %s63
    %p75 = scmp.eq.s32.totalorder %s18, 1
    %p76 = por %p74, %p75
    %p78 = scmp.ne.s32.totalorder %s63, %s77
    %p79 = scmp.eq.s32.totalorder %s18, 0
    %p80 = por %p78, %p79
    %s82 = sadd.s32 %s81, 1
    %p85 = scmp.eq.s32.totalorder %s12, 1
    %p86 = scmp.ne.s32.totalorder %s81, %s83
    %p87 = scmp.eq.s32.totalorder %s12, 0
    %p88 = por %p86, %p87
    %p89 = scmp.ne.s32.totalorder %s81, %s83
    %p90 = scmp.eq.s32.totalorder %s17, 1
    %p91 = por %p89, %p90
    %p92 = scmp.ne.s32.totalorder %s83, %s84
    %p93 = scmp.eq.s32.totalorder %s17, 0
    %p94 = por %p92, %p93
    %p95 = scmp.ne.s32.totalorder %s83, %s84
    %p96 = scmp.eq.s32.totalorder %s18, 1
    %p97 = por %p95, %p96
    %p99 = scmp.ne.s32.totalorder %s84, %s98
    %p100 = scmp.eq.s32.totalorder %s18, 0
    %p101 = por %p99, %p100
    %s102 = ssub.s32 %s19, %s31
    %s103 = ssub.s32 %s20, %s27
    %s104 = sor.u32 %s102, %s103
    %p105 = scmp.eq.s32.totalorder %s104, 0
    %s107 = sadd.s32 %s106, 1
    %s108 = scalar_select %p105, %s106, %s107
    %p111 = pneg %p105
    %p112 = scmp.eq.s32.totalorder %s12, 1
    %p113 = por %p111, %p112
    %p114 = scmp.ne.s32.totalorder %s106, %s109
    %p115 = scmp.eq.s32.totalorder %s12, 0
    %p116 = por %p114, %p115
    %p117 = scmp.ne.s32.totalorder %s106, %s109
    %p118 = scmp.eq.s32.totalorder %s17, 1
    %p119 = por %p117, %p118
    %p120 = scmp.ne.s32.totalorder %s109, %s110
    %p121 = scmp.eq.s32.totalorder %s17, 0
    %p122 = por %p120, %p121
    %p123 = scmp.ne.s32.totalorder %s109, %s110
    %p124 = scmp.eq.s32.totalorder %s18, 1
    %p125 = por %p123, %p124
    %p127 = scmp.ne.s32.totalorder %s110, %s126
    %p128 = scmp.eq.s32.totalorder %s18, 0
    %p129 = por %p127, %p128
    %s130 = ssub.s32 %s19, %s31
    %s131 = ssub.s32 %s20, %s27
    %s132 = sor.u32 %s130, %s131
    %p133 = scmp.eq.s32.totalorder %s132, 0
    %s135 = sadd.s32 %s134, 1
    %s136 = scalar_select %p133, %s134, %s135
    %p139 = pneg %p133
    %p140 = scmp.eq.s32.totalorder %s12, 1
    %p141 = por %p139, %p140
    %p142 = scmp.ne.s32.totalorder %s134, %s137
    %p143 = scmp.eq.s32.totalorder %s12, 0
    %p144 = por %p142, %p143
    %p145 = scmp.ne.s32.totalorder %s134, %s137
    %p146 = scmp.eq.s32.totalorder %s17, 1
    %p147 = por %p145, %p146
    %p148 = scmp.ne.s32.totalorder %s137, %s138
    %p149 = scmp.eq.s32.totalorder %s17, 0
    %p150 = por %p148, %p149
    %p151 = scmp.ne.s32.totalorder %s137, %s138
    %p152 = scmp.eq.s32.totalorder %s18, 1
    %p153 = por %p151, %p152
    %p155 = scmp.ne.s32.totalorder %s138, %s154
    %p156 = scmp.eq.s32.totalorder %s18, 0
    %p157 = por %p155, %p156
    %s158 = ssub.s32 %s19, %s31
    %s159 = ssub.s32 %s20, %s27
    %s160 = sor.u32 %s158, %s159
    %p161 = scmp.eq.s32.totalorder %s160, 0
    %s163 = sadd.s32 %s162, 1
    %s164 = scalar_select %p161, %s162, %s163
    %p167 = pneg %p161
    %p168 = scmp.eq.s32.totalorder %s12, 1
    %p169 = por %p167, %p168
    %p170 = scmp.ne.s32.totalorder %s162, %s165
    %p171 = scmp.eq.s32.totalorder %s12, 0
    %p172 = por %p170, %p171
    %p173 = scmp.ne.s32.totalorder %s162, %s165
    %p174 = scmp.eq.s32.totalorder %s17, 1
    %p175 = por %p173, %p174
    %p176 = scmp.ne.s32.totalorder %s165, %s166
    %p177 = scmp.eq.s32.totalorder %s17, 0
    %p178 = por %p176, %p177
    %p179 = scmp.ne.s32.totalorder %s165, %s166
    %p180 = scmp.eq.s32.totalorder %s18, 1
    %p181 = por %p179, %p180
    %p183 = scmp.ne.s32.totalorder %s166, %s182
    %p184 = scmp.eq.s32.totalorder %s18, 0
    %p185 = por %p183, %p184
    %p186 = scmp.le.s32.totalorder 1, %s12
    %p187 = scmp.lt.s32.totalorder %s12, 3
    %p188 = pnand %p186, %p187
    %p189 = pneg %p188
    // Predicated region
    $region9: #{tpu_custom_call.1} parent=5 // pred_check
      _
    $region10: #{tpu_custom_call.1} parent=5 // pred_check_branch
      %191 = sbr.rel (%p188) target = $region12
    $region11: #{tpu_custom_call.1} parent=5 // pred_region
      %s192 = ssub.s32 %s12, 1
      // Predicated region
      $region13: #{tpu_custom_call.1} parent=11 // pred_check
        %p193 = pneg %p73
      $region14: #{tpu_custom_call.1} parent=11 // pred_check_branch
        %195 = sbr.rel (%p193) target = $region16
      $region15: #{tpu_custom_call.1} parent=11 // pred_region
        _
      $region16: #{tpu_custom_call.1} parent=11 // pred_fallthru
        _
      // Predicated region
      $region17: #{tpu_custom_call.1} parent=11 // pred_check
        %p196 = pneg %p94
      $region18: #{tpu_custom_call.1} parent=11 // pred_check_branch
        %198 = sbr.rel (%p196) target = $region20
      $region19: #{tpu_custom_call.1} parent=11 // pred_region
        _
      $region20: #{tpu_custom_call.1} parent=11 // pred_fallthru
        _
    $region12: #{tpu_custom_call.1} parent=5 // pred_fallthru
      _
    %p199 = scmp.lt.s32.totalorder %s12, 2
    // Predicated region
    $region21: #{tpu_custom_call.1} parent=5 // pred_check
      %p200 = pneg %p199
    $region22: #{tpu_custom_call.1} parent=5 // pred_check_branch
      %202 = sbr.rel (%p200) target = $region24
    $region23: #{tpu_custom_call.1} parent=5 // pred_region
      // Predicated region
      $region25: #{tpu_custom_call.1} parent=23 // pred_check
        %p203 = pneg %p46
      $region26: #{tpu_custom_call.1} parent=23 // pred_check_branch
        %205 = sbr.rel (%p203) target = $region28
      $region27: #{tpu_custom_call.1} parent=23 // pred_region
        %s206 = smul.u32 32, %s20
        %p207 = scmp.lt.s32.totalorder %s19, 1
        %s208 = scalar_select %p207, %s19, 1
        %p209 = scmp.lt.s32.totalorder %s206, 31
        %s210 = scalar_select %p209, %s206, 31
        %s211 = smul.addr %s208, 32
        %s212 = sadd.s32 %s210, %s211
        %s213 = smul.addr %s212, 4
        %s214 = scalar_lea.vmem %s0, %s213
        %s215 = smul.u32 32, %s20
      $region28: #{tpu_custom_call.1} parent=23 // pred_fallthru
        _
    $region24: #{tpu_custom_call.1} parent=5 // pred_fallthru
      _
    %p216 = scmp.le.s32.totalorder 1, %s12
    %p217 = scmp.lt.s32.totalorder %s12, 3
    %p218 = pnand %p216, %p217
    %p219 = pneg %p218
    // Predicated region
    $region29: #{tpu_custom_call.1} parent=5 // pred_check
      _
    $region30: #{tpu_custom_call.1} parent=5 // pred_check_branch
      %221 = sbr.rel (%p218) target = $region32
    $region31: #{tpu_custom_call.1} parent=5 // pred_region
      %s222 = ssub.s32 %s12, 1
      %s223 = smul.u32 32, %s22
      %p224 = scmp.lt.s32.totalorder %s21, 1
      %s225 = scalar_select %p224, %s21, 1
      %p226 = scmp.lt.s32.totalorder %s223, 31
      %s227 = scalar_select %p226, %s223, 31
      %s228 = smul.addr %s225, 32
      %s229 = sadd.s32 %s227, %s228
      %s230 = smul.addr %s229, 4
      %s231 = scalar_lea.vmem %s0, %s230
      %p232 = pneg %p52
      %p233 = pneg %p49
      %p234 = pneg %p73
      %p235 = pneg %p70
      %p236 = pneg %p94
      %p237 = pneg %p91
      %p238 = pneg %p122
      %p239 = pneg %p119
      %s240 = smul.u32 32, %s22
      %p241 = scmp.lt.s32.totalorder %s21, 1
      %s242 = scalar_select %p241, %s21, 1
      %p243 = scmp.lt.s32.totalorder %s240, 31
      %s244 = scalar_select %p243, %s240, 31
      %s245 = smul.addr %s242, 64
      %s246 = sadd.s32 %s244, %s245
      %s247 = smul.addr %s246, 4
      %s248 = scalar_lea.vmem %s3, %s247
      %p249 = pneg %p150
      %p250 = pneg %p147
      %s251 = smul.u32 32, %s22
      %p252 = scmp.lt.s32.totalorder %s21, 1
      %s253 = scalar_select %p252, %s21, 1
      %p254 = scmp.lt.s32.totalorder %s251, 31
      %s255 = scalar_select %p254, %s251, 31
      %s256 = smul.addr %s253, 64
      %s257 = sadd.s32 %s255, %s256
      %s258 = smul.addr %s257, 4
      %s259 = scalar_lea.vmem %s4, %s258
      %p260 = pneg %p178
      %p261 = pneg %p175
      %s262 = smul.u32 32, %s22
      %p263 = scmp.lt.s32.totalorder %s21, 1
      %s264 = scalar_select %p263, %s21, 1
      %p265 = scmp.lt.s32.totalorder %s262, 31
      %s266 = scalar_select %p265, %s262, 31
      %s267 = smul.addr %s264, 64
      %s268 = sadd.s32 %s266, %s267
      %s269 = smul.addr %s268, 4
      %s270 = scalar_lea.vmem %s5, %s269
      %s271 = smul.u32 32, %s22
      %p272 = scmp.lt.s32.totalorder %s21, 1
      %s273 = scalar_select %p272, %s21, 1
      %p274 = scmp.lt.s32.totalorder %s271, 31
      %s275 = scalar_select %p274, %s271, 31
      %s276 = smul.addr %s273, 32
      %s277 = sadd.s32 %s275, %s276
      %s278 = smul.addr %s277, 4
      %s279 = scalar_lea.vmem %s0, %s278
      %s280 = smul.u32 32, %s22
      %s281 = smul.u32 32, %s22
      %p282 = scmp.lt.s32.totalorder %s21, 1
      %s283 = scalar_select %p282, %s21, 1
      %p284 = scmp.lt.s32.totalorder %s281, 31
      %s285 = scalar_select %p284, %s281, 31
      %s286 = smul.addr %s283, 64
      %s287 = sadd.s32 %s285, %s286
      %s288 = smul.addr %s287, 4
      %s289 = scalar_lea.vmem %s3, %s288
      %s290 = smul.u32 32, %s22
      %s291 = smul.u32 32, %s22
      %p292 = scmp.lt.s32.totalorder %s21, 1
      %s293 = scalar_select %p292, %s21, 1
      %p294 = scmp.lt.s32.totalorder %s291, 31
      %s295 = scalar_select %p294, %s291, 31
      %s296 = smul.addr %s293, 64
      %s297 = sadd.s32 %s295, %s296
      %s298 = smul.addr %s297, 4
      %s299 = scalar_lea.vmem %s4, %s298
      %s300 = smul.u32 32, %s22
      %s301 = smul.u32 32, %s22
      %p302 = scmp.lt.s32.totalorder %s21, 1
      %s303 = scalar_select %p302, %s21, 1
      %p304 = scmp.lt.s32.totalorder %s301, 31
      %s305 = scalar_select %p304, %s301, 31
      %s306 = smul.addr %s303, 64
      %s307 = sadd.s32 %s305, %s306
      %s308 = smul.addr %s307, 4
      %s309 = scalar_lea.vmem %s5, %s308
      %s310 = smul.u32 32, %s22
      %v312 = vld [vmem:[%s279] sm:$0xf]
      %v313 = vld [vmem:[%s279 + $0x4] sm:$0xf]
      %v314 = vld [vmem:[%s279 + $0x8] sm:$0xf]
      %v315 = vld [vmem:[%s279 + $0xc] sm:$0xf]
      %v316 = vld [vmem:[%s279 + $0x10] sm:$0xf]
      %v317 = vld [vmem:[%s279 + $0x14] sm:$0xf]
      %v318 = vld [vmem:[%s279 + $0x18] sm:$0xf]
      %v319 = vld [vmem:[%s279 + $0x1c] sm:$0xf]
      %v320 = vld [vmem:[%s279 + $0x20] sm:$0xf]
      %v321 = vld [vmem:[%s279 + $0x24] sm:$0xf]
      %v322 = vld [vmem:[%s279 + $0x28] sm:$0xf]
      %v323 = vld [vmem:[%s279 + $0x2c] sm:$0xf]
      %v324 = vld [vmem:[%s279 + $0x30] sm:$0xf]
      %v325 = vld [vmem:[%s279 + $0x34] sm:$0xf]
      %v326 = vld [vmem:[%s279 + $0x38] sm:$0xf]
      %v327 = vld [vmem:[%s279 + $0x3c] sm:$0xf]
      %v328 = vld [vmem:[%s279 + $0x40] sm:$0xf]
      %v329 = vld [vmem:[%s279 + $0x44] sm:$0xf]
      %v330 = vld [vmem:[%s279 + $0x48] sm:$0xf]
      %v331 = vld [vmem:[%s279 + $0x4c] sm:$0xf]
      %v332 = vld [vmem:[%s279 + $0x50] sm:$0xf]
      %v333 = vld [vmem:[%s279 + $0x54] sm:$0xf]
      %v334 = vld [vmem:[%s279 + $0x58] sm:$0xf]
      %v335 = vld [vmem:[%s279 + $0x5c] sm:$0xf]
      %v336 = vld [vmem:[%s279 + $0x60] sm:$0xf]
      %v337 = vld [vmem:[%s279 + $0x64] sm:$0xf]
      %v338 = vld [vmem:[%s279 + $0x68] sm:$0xf]
      %v339 = vld [vmem:[%s279 + $0x6c] sm:$0xf]
      %v340 = vld [vmem:[%s279 + $0x70] sm:$0xf]
      %v341 = vld [vmem:[%s279 + $0x74] sm:$0xf]
      %v342 = vld [vmem:[%s279 + $0x78] sm:$0xf]
      %v343 = vld [vmem:[%s279 + $0x7c] sm:$0xf]
      %v344 = vld [vmem:[%s1] sm:$0xff]
      %v345 = vld [vmem:[%s1 + $0x8] sm:$0xff]
      %v346 = vld [vmem:[%s1 + $0x10] sm:$0xff]
      %v347 = vld [vmem:[%s1 + $0x18] sm:$0xff]
      %v348 = vld [vmem:[%s2] sm:$0x3]
      %v350 = vperm.slane %v348, 0
      %v351 = vperm.slane %v348, 1
      %v386 = vunpack.c.l.b16 %v312
      %v387 = vunpack.c.l.b16 %v313
      %v388 = vunpack.c.l.b16 %v314
      %v389 = vunpack.c.l.b16 %v315
      %v390 = vunpack.c.l.b16 %v316
      %v391 = vunpack.c.l.b16 %v317
      %v392 = vunpack.c.l.b16 %v318
      %v393 = vunpack.c.l.b16 %v319
      %v394 = vunpack.c.l.b16 %v320
      %v395 = vunpack.c.l.b16 %v321
      %v396 = vunpack.c.l.b16 %v322
      %v397 = vunpack.c.l.b16 %v323
      %v398 = vunpack.c.l.b16 %v324
      %v399 = vunpack.c.l.b16 %v325
      %v400 = vunpack.c.l.b16 %v326
      %v401 = vunpack.c.l.b16 %v327
      %v402 = vunpack.c.l.b16 %v328
      %v403 = vunpack.c.l.b16 %v329
      %v404 = vunpack.c.l.b16 %v330
      %v405 = vunpack.c.l.b16 %v331
      %v406 = vunpack.c.l.b16 %v332
      %v407 = vunpack.c.l.b16 %v333
      %v408 = vunpack.c.l.b16 %v334
      %v409 = vunpack.c.l.b16 %v335
      %v410 = vunpack.c.l.b16 %v336
      %v411 = vunpack.c.l.b16 %v337
      %v412 = vunpack.c.l.b16 %v338
      %v413 = vunpack.c.l.b16 %v339
      %v414 = vunpack.c.l.b16 %v340
      %v415 = vunpack.c.l.b16 %v341
      %v416 = vunpack.c.l.b16 %v342
      %v417 = vunpack.c.l.b16 %v343
      %v418 = vpack.c.b16 %v387, %v386
      %v419 = vpack.c.b16 %v389, %v388
      %v420 = vpack.c.b16 %v391, %v390
      %v421 = vpack.c.b16 %v393, %v392
      %v422 = vpack.c.b16 %v395, %v394
      %v423 = vpack.c.b16 %v397, %v396
      %v424 = vpack.c.b16 %v399, %v398
      %v425 = vpack.c.b16 %v401, %v400
      %v426 = vpack.c.b16 %v403, %v402
      %v427 = vpack.c.b16 %v405, %v404
      %v428 = vpack.c.b16 %v407, %v406
      %v429 = vpack.c.b16 %v409, %v408
      %v430 = vpack.c.b16 %v411, %v410
      %v431 = vpack.c.b16 %v413, %v412
      %v432 = vpack.c.b16 %v415, %v414
      %v433 = vpack.c.b16 %v417, %v416
      %v438 = vunpack.c.l.b16 %v344
      %v439 = vunpack.c.h.b16 %v344
      %v440 = vunpack.c.l.b16 %v345
      %v441 = vunpack.c.h.b16 %v345
      %v442 = vunpack.c.l.b16 %v346
      %v443 = vunpack.c.h.b16 %v346
      %v444 = vunpack.c.l.b16 %v347
      %v445 = vunpack.c.h.b16 %v347
      %v446 = vpack.c.b16 %v440, %v438
      %v447 = vpack.c.b16 %v441, %v439
      %v448 = vpack.c.b16 %v444, %v442
      %v449 = vpack.c.b16 %v445, %v443
      %vm454 = vcmask 261120
      %v456 = vsel %vm454, %v418, 0
      %v459 = vsel %vm454, %v419, 0
      %v462 = vsel %vm454, %v420, 0
      %v465 = vsel %vm454, %v421, 0
      %v468 = vsel %vm454, %v422, 0
      %v471 = vsel %vm454, %v423, 0
      %v474 = vsel %vm454, %v424, 0
      %v477 = vsel %vm454, %v425, 0
      %v480 = vsel %vm454, %v426, 0
      %v483 = vsel %vm454, %v427, 0
      %v486 = vsel %vm454, %v428, 0
      %v489 = vsel %vm454, %v429, 0
      %v492 = vsel %vm454, %v430, 0
      %v495 = vsel %vm454, %v431, 0
      %v498 = vsel %vm454, %v432, 0
      %v501 = vsel %vm454, %v433, 0
      %503 = vmatpush.bf16.msra.mxu0 0
      %504 = vmatpush.bf16.msra.mxu0 0
      %505 = vmatpush.bf16.msra.mxu0 0
      %506 = vmatpush.bf16.msra.mxu0 0
      %507 = vmatpush.bf16.msra.mxu0 0
      %508 = vmatpush.bf16.msra.mxu0 0
      %509 = vmatpush.bf16.msra.mxu0 %v448
      %510 = vmatpush.bf16.msra.mxu0 %v446
      %511 = vmatmul.bf16.gmra.mxu0 %v456
      %v512 = vpop.f32.mrf.mxu0
      %v513 = vadd.f32 %v350, %v512
      %v514 = vpop.f32.mrf.mxu0
      %v515 = vadd.f32 %v350, %v514
      %516 = vmatmul.bf16.gmra.mxu0 %v459
      %v517 = vpop.f32.mrf.mxu0
      %v518 = vadd.f32 %v350, %v517
      %v519 = vpop.f32.mrf.mxu0
      %v520 = vadd.f32 %v350, %v519
      %521 = vmatmul.bf16.gmra.mxu0 %v462
      %v522 = vpop.f32.mrf.mxu0
      %v523 = vadd.f32 %v350, %v522
      %v524 = vpop.f32.mrf.mxu0
      %v525 = vadd.f32 %v350, %v524
      %526 = vmatmul.bf16.gmra.mxu0 %v465
      %v527 = vpop.f32.mrf.mxu0
      %v528 = vadd.f32 %v350, %v527
      %v529 = vpop.f32.mrf.mxu0
      %v530 = vadd.f32 %v350, %v529
      %531 = vmatmul.bf16.gmra.mxu0 %v468
      %v532 = vpop.f32.mrf.mxu0
      %v533 = vadd.f32 %v350, %v532
      %v534 = vpop.f32.mrf.mxu0
      %v535 = vadd.f32 %v350, %v534
      %536 = vmatmul.bf16.gmra.mxu0 %v471
      %v537 = vpop.f32.mrf.mxu0
      %v538 = vadd.f32 %v350, %v537
      %v539 = vpop.f32.mrf.mxu0
      %v540 = vadd.f32 %v350, %v539
      %541 = vmatmul.bf16.gmra.mxu0 %v474
      %v542 = vpop.f32.mrf.mxu0
      %v543 = vadd.f32 %v350, %v542
      %v544 = vpop.f32.mrf.mxu0
      %v545 = vadd.f32 %v350, %v544
      %546 = vmatmul.bf16.gmra.mxu0 %v477
      %v547 = vpop.f32.mrf.mxu0
      %v548 = vadd.f32 %v350, %v547
      %v549 = vpop.f32.mrf.mxu0
      %v550 = vadd.f32 %v350, %v549
      %551 = vmatmul.bf16.gmra.mxu0 %v480
      %v552 = vpop.f32.mrf.mxu0
      %v553 = vadd.f32 %v350, %v552
      %v554 = vpop.f32.mrf.mxu0
      %v555 = vadd.f32 %v350, %v554
      %556 = vmatmul.bf16.gmra.mxu0 %v483
      %v557 = vpop.f32.mrf.mxu0
      %v558 = vadd.f32 %v350, %v557
      %v559 = vpop.f32.mrf.mxu0
      %v560 = vadd.f32 %v350, %v559
      %561 = vmatmul.bf16.gmra.mxu0 %v486
      %v562 = vpop.f32.mrf.mxu0
      %v563 = vadd.f32 %v350, %v562
      %v564 = vpop.f32.mrf.mxu0
      %v565 = vadd.f32 %v350, %v564
      %566 = vmatmul.bf16.gmra.mxu0 %v489
      %v567 = vpop.f32.mrf.mxu0
      %v568 = vadd.f32 %v350, %v567
      %v569 = vpop.f32.mrf.mxu0
      %v570 = vadd.f32 %v350, %v569
      %571 = vmatmul.bf16.gmra.mxu0 %v492
      %v572 = vpop.f32.mrf.mxu0
      %v573 = vadd.f32 %v350, %v572
      %v574 = vpop.f32.mrf.mxu0
      %v575 = vadd.f32 %v350, %v574
      %576 = vmatmul.bf16.gmra.mxu0 %v495
      %v577 = vpop.f32.mrf.mxu0
      %v578 = vadd.f32 %v350, %v577
      %v579 = vpop.f32.mrf.mxu0
      %v580 = vadd.f32 %v350, %v579
      %581 = vmatmul.bf16.gmra.mxu0 %v498
      %v582 = vpop.f32.mrf.mxu0
      %v583 = vadd.f32 %v350, %v582
      %v584 = vpop.f32.mrf.mxu0
      %v585 = vadd.f32 %v350, %v584
      %586 = vmatmul.bf16.gmra.mxu0 %v501
      %v587 = vpop.f32.mrf.mxu0
      %v588 = vadd.f32 %v350, %v587
      %v589 = vpop.f32.mrf.mxu0
      %v590 = vadd.f32 %v350, %v589
      %591 = vdwg.mxu0
      %592 = vmatpush.bf16.msra.mxu0 0
      %593 = vmatpush.bf16.msra.mxu0 0
      %594 = vmatpush.bf16.msra.mxu0 0
      %595 = vmatpush.bf16.msra.mxu0 0
      %596 = vmatpush.bf16.msra.mxu0 0
      %597 = vmatpush.bf16.msra.mxu0 0
      %598 = vmatpush.bf16.msra.mxu0 %v449
      %599 = vmatpush.bf16.msra.mxu0 %v447
      %600 = vmatmul.bf16.gmra.mxu0 %v456
      %v601 = vpop.f32.mrf.mxu0
      %v602 = vadd.f32 %v351, %v601
      %v603 = vpop.f32.mrf.mxu0
      %v604 = vadd.f32 %v351, %v603
      %605 = vmatmul.bf16.gmra.mxu0 %v459
      %v606 = vpop.f32.mrf.mxu0
      %v607 = vadd.f32 %v351, %v606
      %v608 = vpop.f32.mrf.mxu0
      %v609 = vadd.f32 %v351, %v608
      %610 = vmatmul.bf16.gmra.mxu0 %v462
      %v611 = vpop.f32.mrf.mxu0
      %v612 = vadd.f32 %v351, %v611
      %v613 = vpop.f32.mrf.mxu0
      %v614 = vadd.f32 %v351, %v613
      %615 = vmatmul.bf16.gmra.mxu0 %v465
      %v616 = vpop.f32.mrf.mxu0
      %v617 = vadd.f32 %v351, %v616
      %v618 = vpop.f32.mrf.mxu0
      %v619 = vadd.f32 %v351, %v618
      %620 = vmatmul.bf16.gmra.mxu0 %v468
      %v621 = vpop.f32.mrf.mxu0
      %v622 = vadd.f32 %v351, %v621
      %v623 = vpop.f32.mrf.mxu0
      %v624 = vadd.f32 %v351, %v623
      %625 = vmatmul.bf16.gmra.mxu0 %v471
      %v626 = vpop.f32.mrf.mxu0
      %v627 = vadd.f32 %v351, %v626
      %v628 = vpop.f32.mrf.mxu0
      %v629 = vadd.f32 %v351, %v628
      %630 = vmatmul.bf16.gmra.mxu0 %v474
      %v631 = vpop.f32.mrf.mxu0
      %v632 = vadd.f32 %v351, %v631
      %v633 = vpop.f32.mrf.mxu0
      %v634 = vadd.f32 %v351, %v633
      %635 = vmatmul.bf16.gmra.mxu0 %v477
      %v636 = vpop.f32.mrf.mxu0
      %v637 = vadd.f32 %v351, %v636
      %v638 = vpop.f32.mrf.mxu0
      %v639 = vadd.f32 %v351, %v638
      %640 = vmatmul.bf16.gmra.mxu0 %v480
      %v641 = vpop.f32.mrf.mxu0
      %v642 = vadd.f32 %v351, %v641
      %v643 = vpop.f32.mrf.mxu0
      %v644 = vadd.f32 %v351, %v643
      %645 = vmatmul.bf16.gmra.mxu0 %v483
      %v646 = vpop.f32.mrf.mxu0
      %v647 = vadd.f32 %v351, %v646
      %v648 = vpop.f32.mrf.mxu0
      %v649 = vadd.f32 %v351, %v648
      %650 = vmatmul.bf16.gmra.mxu0 %v486
      %v651 = vpop.f32.mrf.mxu0
      %v652 = vadd.f32 %v351, %v651
      %v653 = vpop.f32.mrf.mxu0
      %v654 = vadd.f32 %v351, %v653
      %655 = vmatmul.bf16.gmra.mxu0 %v489
      %v656 = vpop.f32.mrf.mxu0
      %v657 = vadd.f32 %v351, %v656
      %v658 = vpop.f32.mrf.mxu0
      %v659 = vadd.f32 %v351, %v658
      %660 = vmatmul.bf16.gmra.mxu0 %v492
      %v661 = vpop.f32.mrf.mxu0
      %v662 = vadd.f32 %v351, %v661
      %v663 = vpop.f32.mrf.mxu0
      %v664 = vadd.f32 %v351, %v663
      %665 = vmatmul.bf16.gmra.mxu0 %v495
      %v666 = vpop.f32.mrf.mxu0
      %v667 = vadd.f32 %v351, %v666
      %v668 = vpop.f32.mrf.mxu0
      %v669 = vadd.f32 %v351, %v668
      %670 = vmatmul.bf16.gmra.mxu0 %v498
      %v671 = vpop.f32.mrf.mxu0
      %v672 = vadd.f32 %v351, %v671
      %v673 = vpop.f32.mrf.mxu0
      %v674 = vadd.f32 %v351, %v673
      %675 = vmatmul.bf16.gmra.mxu0 %v501
      %v676 = vpop.f32.mrf.mxu0
      %v677 = vadd.f32 %v351, %v676
      %v678 = vpop.f32.mrf.mxu0
      %v679 = vadd.f32 %v351, %v678
      %680 = vdwg.mxu0
      %v681 = vpack.c.bf16 %v602, %v513
      %v682 = vpack.c.bf16 %v604, %v515
      %v683 = vpack.c.bf16 %v607, %v518
      %v684 = vpack.c.bf16 %v609, %v520
      %v685 = vpack.c.bf16 %v612, %v523
      %v686 = vpack.c.bf16 %v614, %v525
      %v687 = vpack.c.bf16 %v617, %v528
      %v688 = vpack.c.bf16 %v619, %v530
      %v689 = vpack.c.bf16 %v622, %v533
      %v690 = vpack.c.bf16 %v624, %v535
      %v691 = vpack.c.bf16 %v627, %v538
      %v692 = vpack.c.bf16 %v629, %v540
      %v693 = vpack.c.bf16 %v632, %v543
      %v694 = vpack.c.bf16 %v634, %v545
      %v695 = vpack.c.bf16 %v637, %v548
      %v696 = vpack.c.bf16 %v639, %v550
      %v697 = vpack.c.bf16 %v642, %v553
      %v698 = vpack.c.bf16 %v644, %v555
      %v699 = vpack.c.bf16 %v647, %v558
      %v700 = vpack.c.bf16 %v649, %v560
      %v701 = vpack.c.bf16 %v652, %v563
      %v702 = vpack.c.bf16 %v654, %v565
      %v703 = vpack.c.bf16 %v657, %v568
      %v704 = vpack.c.bf16 %v659, %v570
      %v705 = vpack.c.bf16 %v662, %v573
      %v706 = vpack.c.bf16 %v664, %v575
      %v707 = vpack.c.bf16 %v667, %v578
      %v708 = vpack.c.bf16 %v669, %v580
      %v709 = vpack.c.bf16 %v672, %v583
      %v710 = vpack.c.bf16 %v674, %v585
      %v711 = vpack.c.bf16 %v677, %v588
      %v712 = vpack.c.bf16 %v679, %v590
      %vm713 = vcmask 257024
      %714 = vst.msk [vmem:[%s289] sm:$0xf] %vm713, %v681
      %715 = vst.msk [vmem:[%s289 + $0x4] sm:$0xf] %vm713, %v682
      %716 = vst.msk [vmem:[%s289 + $0x8] sm:$0xf] %vm713, %v683
      %717 = vst.msk [vmem:[%s289 + $0xc] sm:$0xf] %vm713, %v684
      %718 = vst.msk [vmem:[%s289 + $0x10] sm:$0xf] %vm713, %v685
      %719 = vst.msk [vmem:[%s289 + $0x14] sm:$0xf] %vm713, %v686
      %720 = vst.msk [vmem:[%s289 + $0x18] sm:$0xf] %vm713, %v687
      %721 = vst.msk [vmem:[%s289 + $0x1c] sm:$0xf] %vm713, %v688
      %722 = vst.msk [vmem:[%s289 + $0x20] sm:$0xf] %vm713, %v689
      %723 = vst.msk [vmem:[%s289 + $0x24] sm:$0xf] %vm713, %v690
      %724 = vst.msk [vmem:[%s289 + $0x28] sm:$0xf] %vm713, %v691
      %725 = vst.msk [vmem:[%s289 + $0x2c] sm:$0xf] %vm713, %v692
      %726 = vst.msk [vmem:[%s289 + $0x30] sm:$0xf] %vm713, %v693
      %727 = vst.msk [vmem:[%s289 + $0x34] sm:$0xf] %vm713, %v694
      %728 = vst.msk [vmem:[%s289 + $0x38] sm:$0xf] %vm713, %v695
      %729 = vst.msk [vmem:[%s289 + $0x3c] sm:$0xf] %vm713, %v696
      %730 = vst.msk [vmem:[%s289 + $0x40] sm:$0xf] %vm713, %v697
      %731 = vst.msk [vmem:[%s289 + $0x44] sm:$0xf] %vm713, %v698
      %732 = vst.msk [vmem:[%s289 + $0x48] sm:$0xf] %vm713, %v699
      %733 = vst.msk [vmem:[%s289 + $0x4c] sm:$0xf] %vm713, %v700
      %734 = vst.msk [vmem:[%s289 + $0x50] sm:$0xf] %vm713, %v701
      %735 = vst.msk [vmem:[%s289 + $0x54] sm:$0xf] %vm713, %v702
      %736 = vst.msk [vmem:[%s289 + $0x58] sm:$0xf] %vm713, %v703
      %737 = vst.msk [vmem:[%s289 + $0x5c] sm:$0xf] %vm713, %v704
      %738 = vst.msk [vmem:[%s289 + $0x60] sm:$0xf] %vm713, %v705
      %739 = vst.msk [vmem:[%s289 + $0x64] sm:$0xf] %vm713, %v706
      %740 = vst.msk [vmem:[%s289 + $0x68] sm:$0xf] %vm713, %v707
      %741 = vst.msk [vmem:[%s289 + $0x6c] sm:$0xf] %vm713, %v708
      %742 = vst.msk [vmem:[%s289 + $0x70] sm:$0xf] %vm713, %v709
      %743 = vst.msk [vmem:[%s289 + $0x74] sm:$0xf] %vm713, %v710
      %744 = vst.msk [vmem:[%s289 + $0x78] sm:$0xf] %vm713, %v711
      %745 = vst.msk [vmem:[%s289 + $0x7c] sm:$0xf] %vm713, %v712
      %778 = vrot.lane.b32.xlu0 %v681, 64
      %v779 = vpop.permute.xlu0 %778
      %780 = vrot.lane.b32.xlu0 %v682, 64
      %v781 = vpop.permute.xlu0 %780
      %782 = vrot.lane.b32.xlu0 %v683, 64
      %v783 = vpop.permute.xlu0 %782
      %784 = vrot.lane.b32.xlu0 %v684, 64
      %v785 = vpop.permute.xlu0 %784
      %786 = vrot.lane.b32.xlu0 %v685, 64
      %v787 = vpop.permute.xlu0 %786
      %788 = vrot.lane.b32.xlu0 %v686, 64
      %v789 = vpop.permute.xlu0 %788
      %790 = vrot.lane.b32.xlu0 %v687, 64
      %v791 = vpop.permute.xlu0 %790
      %792 = vrot.lane.b32.xlu0 %v688, 64
      %v793 = vpop.permute.xlu0 %792
      %794 = vrot.lane.b32.xlu0 %v689, 64
      %v795 = vpop.permute.xlu0 %794
      %796 = vrot.lane.b32.xlu0 %v690, 64
      %v797 = vpop.permute.xlu0 %796
      %798 = vrot.lane.b32.xlu0 %v691, 64
      %v799 = vpop.permute.xlu0 %798
      %800 = vrot.lane.b32.xlu0 %v692, 64
      %v801 = vpop.permute.xlu0 %800
      %802 = vrot.lane.b32.xlu0 %v693, 64
      %v803 = vpop.permute.xlu0 %802
      %804 = vrot.lane.b32.xlu0 %v694, 64
      %v805 = vpop.permute.xlu0 %804
      %806 = vrot.lane.b32.xlu0 %v695, 64
      %v807 = vpop.permute.xlu0 %806
      %808 = vrot.lane.b32.xlu0 %v696, 64
      %v809 = vpop.permute.xlu0 %808
      %810 = vrot.lane.b32.xlu0 %v697, 64
      %v811 = vpop.permute.xlu0 %810
      %812 = vrot.lane.b32.xlu0 %v698, 64
      %v813 = vpop.permute.xlu0 %812
      %814 = vrot.lane.b32.xlu0 %v699, 64
      %v815 = vpop.permute.xlu0 %814
      %816 = vrot.lane.b32.xlu0 %v700, 64
      %v817 = vpop.permute.xlu0 %816
      %818 = vrot.lane.b32.xlu0 %v701, 64
      %v819 = vpop.permute.xlu0 %818
      %820 = vrot.lane.b32.xlu0 %v702, 64
      %v821 = vpop.permute.xlu0 %820
      %822 = vrot.lane.b32.xlu0 %v703, 64
      %v823 = vpop.permute.xlu0 %822
      %824 = vrot.lane.b32.xlu0 %v704, 64
      %v825 = vpop.permute.xlu0 %824
      %826 = vrot.lane.b32.xlu0 %v705, 64
      %v827 = vpop.permute.xlu0 %826
      %828 = vrot.lane.b32.xlu0 %v706, 64
      %v829 = vpop.permute.xlu0 %828
      %830 = vrot.lane.b32.xlu0 %v707, 64
      %v831 = vpop.permute.xlu0 %830
      %832 = vrot.lane.b32.xlu0 %v708, 64
      %v833 = vpop.permute.xlu0 %832
      %834 = vrot.lane.b32.xlu0 %v709, 64
      %v835 = vpop.permute.xlu0 %834
      %836 = vrot.lane.b32.xlu0 %v710, 64
      %v837 = vpop.permute.xlu0 %836
      %838 = vrot.lane.b32.xlu0 %v711, 64
      %v839 = vpop.permute.xlu0 %838
      %840 = vrot.lane.b32.xlu0 %v712, 64
      %v841 = vpop.permute.xlu0 %840
      %874 = vst.msk [vmem:[%s299] sm:$0xf] %vm713, %v779
      %875 = vst.msk [vmem:[%s299 + $0x4] sm:$0xf] %vm713, %v781
      %876 = vst.msk [vmem:[%s299 + $0x8] sm:$0xf] %vm713, %v783
      %877 = vst.msk [vmem:[%s299 + $0xc] sm:$0xf] %vm713, %v785
      %878 = vst.msk [vmem:[%s299 + $0x10] sm:$0xf] %vm713, %v787
      %879 = vst.msk [vmem:[%s299 + $0x14] sm:$0xf] %vm713, %v789
      %880 = vst.msk [vmem:[%s299 + $0x18] sm:$0xf] %vm713, %v791
      %881 = vst.msk [vmem:[%s299 + $0x1c] sm:$0xf] %vm713, %v793
      %882 = vst.msk [vmem:[%s299 + $0x20] sm:$0xf] %vm713, %v795
      %883 = vst.msk [vmem:[%s299 + $0x24] sm:$0xf] %vm713, %v797
      %884 = vst.msk [vmem:[%s299 + $0x28] sm:$0xf] %vm713, %v799
      %885 = vst.msk [vmem:[%s299 + $0x2c] sm:$0xf] %vm713, %v801
      %886 = vst.msk [vmem:[%s299 + $0x30] sm:$0xf] %vm713, %v803
      %887 = vst.msk [vmem:[%s299 + $0x34] sm:$0xf] %vm713, %v805
      %888 = vst.msk [vmem:[%s299 + $0x38] sm:$0xf] %vm713, %v807
      %889 = vst.msk [vmem:[%s299 + $0x3c] sm:$0xf] %vm713, %v809
      %890 = vst.msk [vmem:[%s299 + $0x40] sm:$0xf] %vm713, %v811
      %891 = vst.msk [vmem:[%s299 + $0x44] sm:$0xf] %vm713, %v813
      %892 = vst.msk [vmem:[%s299 + $0x48] sm:$0xf] %vm713, %v815
      %893 = vst.msk [vmem:[%s299 + $0x4c] sm:$0xf] %vm713, %v817
      %894 = vst.msk [vmem:[%s299 + $0x50] sm:$0xf] %vm713, %v819
      %895 = vst.msk [vmem:[%s299 + $0x54] sm:$0xf] %vm713, %v821
      %896 = vst.msk [vmem:[%s299 + $0x58] sm:$0xf] %vm713, %v823
      %897 = vst.msk [vmem:[%s299 + $0x5c] sm:$0xf] %vm713, %v825
      %898 = vst.msk [vmem:[%s299 + $0x60] sm:$0xf] %vm713, %v827
      %899 = vst.msk [vmem:[%s299 + $0x64] sm:$0xf] %vm713, %v829
      %900 = vst.msk [vmem:[%s299 + $0x68] sm:$0xf] %vm713, %v831
      %901 = vst.msk [vmem:[%s299 + $0x6c] sm:$0xf] %vm713, %v833
      %902 = vst.msk [vmem:[%s299 + $0x70] sm:$0xf] %vm713, %v835
      %903 = vst.msk [vmem:[%s299 + $0x74] sm:$0xf] %vm713, %v837
      %904 = vst.msk [vmem:[%s299 + $0x78] sm:$0xf] %vm713, %v839
      %905 = vst.msk [vmem:[%s299 + $0x7c] sm:$0xf] %vm713, %v841
      %v906 = vrot.slane %v681, 4
      %v907 = vrot.slane %v682, 4
      %v908 = vrot.slane %v683, 4
      %v909 = vrot.slane %v684, 4
      %v910 = vrot.slane %v685, 4
      %v911 = vrot.slane %v686, 4
      %v912 = vrot.slane %v687, 4
      %v913 = vrot.slane %v688, 4
      %v914 = vrot.slane %v689, 4
      %v915 = vrot.slane %v690, 4
      %v916 = vrot.slane %v691, 4
      %v917 = vrot.slane %v692, 4
      %v918 = vrot.slane %v693, 4
      %v919 = vrot.slane %v694, 4
      %v920 = vrot.slane %v695, 4
      %v921 = vrot.slane %v696, 4
      %v922 = vrot.slane %v697, 4
      %v923 = vrot.slane %v698, 4
      %v924 = vrot.slane %v699, 4
      %v925 = vrot.slane %v700, 4
      %v926 = vrot.slane %v701, 4
      %v927 = vrot.slane %v702, 4
      %v928 = vrot.slane %v703, 4
      %v929 = vrot.slane %v704, 4
      %v930 = vrot.slane %v705, 4
      %v931 = vrot.slane %v706, 4
      %v932 = vrot.slane %v707, 4
      %v933 = vrot.slane %v708, 4
      %v934 = vrot.slane %v709, 4
      %v935 = vrot.slane %v710, 4
      %v936 = vrot.slane %v711, 4
      %v937 = vrot.slane %v712, 4
      %970 = vst.msk [vmem:[%s309] sm:$0xf] %vm713, %v906
      %971 = vst.msk [vmem:[%s309 + $0x4] sm:$0xf] %vm713, %v907
      %972 = vst.msk [vmem:[%s309 + $0x8] sm:$0xf] %vm713, %v908
      %973 = vst.msk [vmem:[%s309 + $0xc] sm:$0xf] %vm713, %v909
      %974 = vst.msk [vmem:[%s309 + $0x10] sm:$0xf] %vm713, %v910
      %975 = vst.msk [vmem:[%s309 + $0x14] sm:$0xf] %vm713, %v911
      %976 = vst.msk [vmem:[%s309 + $0x18] sm:$0xf] %vm713, %v912
      %977 = vst.msk [vmem:[%s309 + $0x1c] sm:$0xf] %vm713, %v913
      %978 = vst.msk [vmem:[%s309 + $0x20] sm:$0xf] %vm713, %v914
      %979 = vst.msk [vmem:[%s309 + $0x24] sm:$0xf] %vm713, %v915
      %980 = vst.msk [vmem:[%s309 + $0x28] sm:$0xf] %vm713, %v916
      %981 = vst.msk [vmem:[%s309 + $0x2c] sm:$0xf] %vm713, %v917
      %982 = vst.msk [vmem:[%s309 + $0x30] sm:$0xf] %vm713, %v918
      %983 = vst.msk [vmem:[%s309 + $0x34] sm:$0xf] %vm713, %v919
      %984 = vst.msk [vmem:[%s309 + $0x38] sm:$0xf] %vm713, %v920
      %985 = vst.msk [vmem:[%s309 + $0x3c] sm:$0xf] %vm713, %v921
      %986 = vst.msk [vmem:[%s309 + $0x40] sm:$0xf] %vm713, %v922
      %987 = vst.msk [vmem:[%s309 + $0x44] sm:$0xf] %vm713, %v923
      %988 = vst.msk [vmem:[%s309 + $0x48] sm:$0xf] %vm713, %v924
      %989 = vst.msk [vmem:[%s309 + $0x4c] sm:$0xf] %vm713, %v925
      %990 = vst.msk [vmem:[%s309 + $0x50] sm:$0xf] %vm713, %v926
      %991 = vst.msk [vmem:[%s309 + $0x54] sm:$0xf] %vm713, %v927
      %992 = vst.msk [vmem:[%s309 + $0x58] sm:$0xf] %vm713, %v928
      %993 = vst.msk [vmem:[%s309 + $0x5c] sm:$0xf] %vm713, %v929
      %994 = vst.msk [vmem:[%s309 + $0x60] sm:$0xf] %vm713, %v930
      %995 = vst.msk [vmem:[%s309 + $0x64] sm:$0xf] %vm713, %v931
      %996 = vst.msk [vmem:[%s309 + $0x68] sm:$0xf] %vm713, %v932
      %997 = vst.msk [vmem:[%s309 + $0x6c] sm:$0xf] %vm713, %v933
      %998 = vst.msk [vmem:[%s309 + $0x70] sm:$0xf] %vm713, %v934
      %999 = vst.msk [vmem:[%s309 + $0x74] sm:$0xf] %vm713, %v935
      %1000 = vst.msk [vmem:[%s309 + $0x78] sm:$0xf] %vm713, %v936
      %1001 = vst.msk [vmem:[%s309 + $0x7c] sm:$0xf] %vm713, %v937
      %1002 = vrot.lane.b32.xlu0 %v681, 96
      %v1003 = vpop.permute.xlu0 %1002
      %1004 = vrot.lane.b32.xlu0 %v682, 96
      %v1005 = vpop.permute.xlu0 %1004
      %1006 = vrot.lane.b32.xlu0 %v683, 96
      %v1007 = vpop.permute.xlu0 %1006
      %1008 = vrot.lane.b32.xlu0 %v684, 96
      %v1009 = vpop.permute.xlu0 %1008
      %1010 = vrot.lane.b32.xlu0 %v685, 96
      %v1011 = vpop.permute.xlu0 %1010
      %1012 = vrot.lane.b32.xlu0 %v686, 96
      %v1013 = vpop.permute.xlu0 %1012
      %1014 = vrot.lane.b32.xlu0 %v687, 96
      %v1015 = vpop.permute.xlu0 %1014
      %1016 = vrot.lane.b32.xlu0 %v688, 96
      %v1017 = vpop.permute.xlu0 %1016
      %1018 = vrot.lane.b32.xlu0 %v689, 96
      %v1019 = vpop.permute.xlu0 %1018
      %1020 = vrot.lane.b32.xlu0 %v690, 96
      %v1021 = vpop.permute.xlu0 %1020
      %1022 = vrot.lane.b32.xlu0 %v691, 96
      %v1023 = vpop.permute.xlu0 %1022
      %1024 = vrot.lane.b32.xlu0 %v692, 96
      %v1025 = vpop.permute.xlu0 %1024
      %1026 = vrot.lane.b32.xlu0 %v693, 96
      %v1027 = vpop.permute.xlu0 %1026
      %1028 = vrot.lane.b32.xlu0 %v694, 96
      %v1029 = vpop.permute.xlu0 %1028
      %1030 = vrot.lane.b32.xlu0 %v695, 96
      %v1031 = vpop.permute.xlu0 %1030
      %1032 = vrot.lane.b32.xlu0 %v696, 96
      %v1033 = vpop.permute.xlu0 %1032
      %1034 = vrot.lane.b32.xlu0 %v697, 96
      %v1035 = vpop.permute.xlu0 %1034
      %1036 = vrot.lane.b32.xlu0 %v698, 96
      %v1037 = vpop.permute.xlu0 %1036
      %1038 = vrot.lane.b32.xlu0 %v699, 96
      %v1039 = vpop.permute.xlu0 %1038
      %1040 = vrot.lane.b32.xlu0 %v700, 96
      %v1041 = vpop.permute.xlu0 %1040
      %1042 = vrot.lane.b32.xlu0 %v701, 96
      %v1043 = vpop.permute.xlu0 %1042
      %1044 = vrot.lane.b32.xlu0 %v702, 96
      %v1045 = vpop.permute.xlu0 %1044
      %1046 = vrot.lane.b32.xlu0 %v703, 96
      %v1047 = vpop.permute.xlu0 %1046
      %1048 = vrot.lane.b32.xlu0 %v704, 96
      %v1049 = vpop.permute.xlu0 %1048
      %1050 = vrot.lane.b32.xlu0 %v705, 96
      %v1051 = vpop.permute.xlu0 %1050
      %1052 = vrot.lane.b32.xlu0 %v706, 96
      %v1053 = vpop.permute.xlu0 %1052
      %1054 = vrot.lane.b32.xlu0 %v707, 96
      %v1055 = vpop.permute.xlu0 %1054
      %1056 = vrot.lane.b32.xlu0 %v708, 96
      %v1057 = vpop.permute.xlu0 %1056
      %1058 = vrot.lane.b32.xlu0 %v709, 96
      %v1059 = vpop.permute.xlu0 %1058
      %1060 = vrot.lane.b32.xlu0 %v710, 96
      %v1061 = vpop.permute.xlu0 %1060
      %1062 = vrot.lane.b32.xlu0 %v711, 96
      %v1063 = vpop.permute.xlu0 %1062
      %1064 = vrot.lane.b32.xlu0 %v712, 96
      %v1065 = vpop.permute.xlu0 %1064
      %s1098 = scalar_lea.vmem %s289, 128
      %1099 = vst.msk [vmem:[%s1098] sm:$0xf] %vm713, %v1003
      %1100 = vst.msk [vmem:[%s1098 + $0x4] sm:$0xf] %vm713, %v1005
      %1101 = vst.msk [vmem:[%s1098 + $0x8] sm:$0xf] %vm713, %v1007
      %1102 = vst.msk [vmem:[%s1098 + $0xc] sm:$0xf] %vm713, %v1009
      %1103 = vst.msk [vmem:[%s1098 + $0x10] sm:$0xf] %vm713, %v1011
      %1104 = vst.msk [vmem:[%s1098 + $0x14] sm:$0xf] %vm713, %v1013
      %1105 = vst.msk [vmem:[%s1098 + $0x18] sm:$0xf] %vm713, %v1015
      %1106 = vst.msk [vmem:[%s1098 + $0x1c] sm:$0xf] %vm713, %v1017
      %1107 = vst.msk [vmem:[%s1098 + $0x20] sm:$0xf] %vm713, %v1019
      %1108 = vst.msk [vmem:[%s1098 + $0x24] sm:$0xf] %vm713, %v1021
      %1109 = vst.msk [vmem:[%s1098 + $0x28] sm:$0xf] %vm713, %v1023
      %1110 = vst.msk [vmem:[%s1098 + $0x2c] sm:$0xf] %vm713, %v1025
      %1111 = vst.msk [vmem:[%s1098 + $0x30] sm:$0xf] %vm713, %v1027
      %1112 = vst.msk [vmem:[%s1098 + $0x34] sm:$0xf] %vm713, %v1029
      %1113 = vst.msk [vmem:[%s1098 + $0x38] sm:$0xf] %vm713, %v1031
      %1114 = vst.msk [vmem:[%s1098 + $0x3c] sm:$0xf] %vm713, %v1033
      %1115 = vst.msk [vmem:[%s1098 + $0x40] sm:$0xf] %vm713, %v1035
      %1116 = vst.msk [vmem:[%s1098 + $0x44] sm:$0xf] %vm713, %v1037
      %1117 = vst.msk [vmem:[%s1098 + $0x48] sm:$0xf] %vm713, %v1039
      %1118 = vst.msk [vmem:[%s1098 + $0x4c] sm:$0xf] %vm713, %v1041
      %1119 = vst.msk [vmem:[%s1098 + $0x50] sm:$0xf] %vm713, %v1043
      %1120 = vst.msk [vmem:[%s1098 + $0x54] sm:$0xf] %vm713, %v1045
      %1121 = vst.msk [vmem:[%s1098 + $0x58] sm:$0xf] %vm713, %v1047
      %1122 = vst.msk [vmem:[%s1098 + $0x5c] sm:$0xf] %vm713, %v1049
      %1123 = vst.msk [vmem:[%s1098 + $0x60] sm:$0xf] %vm713, %v1051
      %1124 = vst.msk [vmem:[%s1098 + $0x64] sm:$0xf] %vm713, %v1053
      %1125 = vst.msk [vmem:[%s1098 + $0x68] sm:$0xf] %vm713, %v1055
      %1126 = vst.msk [vmem:[%s1098 + $0x6c] sm:$0xf] %vm713, %v1057
      %1127 = vst.msk [vmem:[%s1098 + $0x70] sm:$0xf] %vm713, %v1059
      %1128 = vst.msk [vmem:[%s1098 + $0x74] sm:$0xf] %vm713, %v1061
      %1129 = vst.msk [vmem:[%s1098 + $0x78] sm:$0xf] %vm713, %v1063
      %1130 = vst.msk [vmem:[%s1098 + $0x7c] sm:$0xf] %vm713, %v1065
      %1131 = vrot.lane.b32.xlu0 %v681, 32
      %v1132 = vpop.permute.xlu0 %1131
      %1133 = vrot.lane.b32.xlu0 %v682, 32
      %v1134 = vpop.permute.xlu0 %1133
      %1135 = vrot.lane.b32.xlu0 %v683, 32
      %v1136 = vpop.permute.xlu0 %1135
      %1137 = vrot.lane.b32.xlu0 %v684, 32
      %v1138 = vpop.permute.xlu0 %1137
      %1139 = vrot.lane.b32.xlu0 %v685, 32
      %v1140 = vpop.permute.xlu0 %1139
      %1141 = vrot.lane.b32.xlu0 %v686, 32
      %v1142 = vpop.permute.xlu0 %1141
      %1143 = vrot.lane.b32.xlu0 %v687, 32
      %v1144 = vpop.permute.xlu0 %1143
      %1145 = vrot.lane.b32.xlu0 %v688, 32
      %v1146 = vpop.permute.xlu0 %1145
      %1147 = vrot.lane.b32.xlu0 %v689, 32
      %v1148 = vpop.permute.xlu0 %1147
      %1149 = vrot.lane.b32.xlu0 %v690, 32
      %v1150 = vpop.permute.xlu0 %1149
      %1151 = vrot.lane.b32.xlu0 %v691, 32
      %v1152 = vpop.permute.xlu0 %1151
      %1153 = vrot.lane.b32.xlu0 %v692, 32
      %v1154 = vpop.permute.xlu0 %1153
      %1155 = vrot.lane.b32.xlu0 %v693, 32
      %v1156 = vpop.permute.xlu0 %1155
      %1157 = vrot.lane.b32.xlu0 %v694, 32
      %v1158 = vpop.permute.xlu0 %1157
      %1159 = vrot.lane.b32.xlu0 %v695, 32
      %v1160 = vpop.permute.xlu0 %1159
      %1161 = vrot.lane.b32.xlu0 %v696, 32
      %v1162 = vpop.permute.xlu0 %1161
      %1163 = vrot.lane.b32.xlu0 %v697, 32
      %v1164 = vpop.permute.xlu0 %1163
      %1165 = vrot.lane.b32.xlu0 %v698, 32
      %v1166 = vpop.permute.xlu0 %1165
      %1167 = vrot.lane.b32.xlu0 %v699, 32
      %v1168 = vpop.permute.xlu0 %1167
      %1169 = vrot.lane.b32.xlu0 %v700, 32
      %v1170 = vpop.permute.xlu0 %1169
      %1171 = vrot.lane.b32.xlu0 %v701, 32
      %v1172 = vpop.permute.xlu0 %1171
      %1173 = vrot.lane.b32.xlu0 %v702, 32
      %v1174 = vpop.permute.xlu0 %1173
      %1175 = vrot.lane.b32.xlu0 %v703, 32
      %v1176 = vpop.permute.xlu0 %1175
      %1177 = vrot.lane.b32.xlu0 %v704, 32
      %v1178 = vpop.permute.xlu0 %1177
      %1179 = vrot.lane.b32.xlu0 %v705, 32
      %v1180 = vpop.permute.xlu0 %1179
      %1181 = vrot.lane.b32.xlu0 %v706, 32
      %v1182 = vpop.permute.xlu0 %1181
      %1183 = vrot.lane.b32.xlu0 %v707, 32
      %v1184 = vpop.permute.xlu0 %1183
      %1185 = vrot.lane.b32.xlu0 %v708, 32
      %v1186 = vpop.permute.xlu0 %1185
      %1187 = vrot.lane.b32.xlu0 %v709, 32
      %v1188 = vpop.permute.xlu0 %1187
      %1189 = vrot.lane.b32.xlu0 %v710, 32
      %v1190 = vpop.permute.xlu0 %1189
      %1191 = vrot.lane.b32.xlu0 %v711, 32
      %v1192 = vpop.permute.xlu0 %1191
      %1193 = vrot.lane.b32.xlu0 %v712, 32
      %v1194 = vpop.permute.xlu0 %1193
      %s1227 = scalar_lea.vmem %s299, 128
      %1228 = vst.msk [vmem:[%s1227] sm:$0xf] %vm713, %v1132
      %1229 = vst.msk [vmem:[%s1227 + $0x4] sm:$0xf] %vm713, %v1134
      %1230 = vst.msk [vmem:[%s1227 + $0x8] sm:$0xf] %vm713, %v1136
      %1231 = vst.msk [vmem:[%s1227 + $0xc] sm:$0xf] %vm713, %v1138
      %1232 = vst.msk [vmem:[%s1227 + $0x10] sm:$0xf] %vm713, %v1140
      %1233 = vst.msk [vmem:[%s1227 + $0x14] sm:$0xf] %vm713, %v1142
      %1234 = vst.msk [vmem:[%s1227 + $0x18] sm:$0xf] %vm713, %v1144
      %1235 = vst.msk [vmem:[%s1227 + $0x1c] sm:$0xf] %vm713, %v1146
      %1236 = vst.msk [vmem:[%s1227 + $0x20] sm:$0xf] %vm713, %v1148
      %1237 = vst.msk [vmem:[%s1227 + $0x24] sm:$0xf] %vm713, %v1150
      %1238 = vst.msk [vmem:[%s1227 + $0x28] sm:$0xf] %vm713, %v1152
      %1239 = vst.msk [vmem:[%s1227 + $0x2c] sm:$0xf] %vm713, %v1154
      %1240 = vst.msk [vmem:[%s1227 + $0x30] sm:$0xf] %vm713, %v1156
      %1241 = vst.msk [vmem:[%s1227 + $0x34] sm:$0xf] %vm713, %v1158
      %1242 = vst.msk [vmem:[%s1227 + $0x38] sm:$0xf] %vm713, %v1160
      %1243 = vst.msk [vmem:[%s1227 + $0x3c] sm:$0xf] %vm713, %v1162
      %1244 = vst.msk [vmem:[%s1227 + $0x40] sm:$0xf] %vm713, %v1164
      %1245 = vst.msk [vmem:[%s1227 + $0x44] sm:$0xf] %vm713, %v1166
      %1246 = vst.msk [vmem:[%s1227 + $0x48] sm:$0xf] %vm713, %v1168
      %1247 = vst.msk [vmem:[%s1227 + $0x4c] sm:$0xf] %vm713, %v1170
      %1248 = vst.msk [vmem:[%s1227 + $0x50] sm:$0xf] %vm713, %v1172
      %1249 = vst.msk [vmem:[%s1227 + $0x54] sm:$0xf] %vm713, %v1174
      %1250 = vst.msk [vmem:[%s1227 + $0x58] sm:$0xf] %vm713, %v1176
      %1251 = vst.msk [vmem:[%s1227 + $0x5c] sm:$0xf] %vm713, %v1178
      %1252 = vst.msk [vmem:[%s1227 + $0x60] sm:$0xf] %vm713, %v1180
      %1253 = vst.msk [vmem:[%s1227 + $0x64] sm:$0xf] %vm713, %v1182
      %1254 = vst.msk [vmem:[%s1227 + $0x68] sm:$0xf] %vm713, %v1184
      %1255 = vst.msk [vmem:[%s1227 + $0x6c] sm:$0xf] %vm713, %v1186
      %1256 = vst.msk [vmem:[%s1227 + $0x70] sm:$0xf] %vm713, %v1188
      %1257 = vst.msk [vmem:[%s1227 + $0x74] sm:$0xf] %vm713, %v1190
      %1258 = vst.msk [vmem:[%s1227 + $0x78] sm:$0xf] %vm713, %v1192
      %1259 = vst.msk [vmem:[%s1227 + $0x7c] sm:$0xf] %vm713, %v1194
      %v1260 = vrot.slane %v1003, 4
      %v1261 = vrot.slane %v1005, 4
      %v1262 = vrot.slane %v1007, 4
      %v1263 = vrot.slane %v1009, 4
      %v1264 = vrot.slane %v1011, 4
      %v1265 = vrot.slane %v1013, 4
      %v1266 = vrot.slane %v1015, 4
      %v1267 = vrot.slane %v1017, 4
      %v1268 = vrot.slane %v1019, 4
      %v1269 = vrot.slane %v1021, 4
      %v1270 = vrot.slane %v1023, 4
      %v1271 = vrot.slane %v1025, 4
      %v1272 = vrot.slane %v1027, 4
      %v1273 = vrot.slane %v1029, 4
      %v1274 = vrot.slane %v1031, 4
      %v1275 = vrot.slane %v1033, 4
      %v1276 = vrot.slane %v1035, 4
      %v1277 = vrot.slane %v1037, 4
      %v1278 = vrot.slane %v1039, 4
      %v1279 = vrot.slane %v1041, 4
      %v1280 = vrot.slane %v1043, 4
      %v1281 = vrot.slane %v1045, 4
      %v1282 = vrot.slane %v1047, 4
      %v1283 = vrot.slane %v1049, 4
      %v1284 = vrot.slane %v1051, 4
      %v1285 = vrot.slane %v1053, 4
      %v1286 = vrot.slane %v1055, 4
      %v1287 = vrot.slane %v1057, 4
      %v1288 = vrot.slane %v1059, 4
      %v1289 = vrot.slane %v1061, 4
      %v1290 = vrot.slane %v1063, 4
      %v1291 = vrot.slane %v1065, 4
      %s1324 = scalar_lea.vmem %s309, 128
      %1325 = vst.msk [vmem:[%s1324] sm:$0xf] %vm713, %v1260
      %1326 = vst.msk [vmem:[%s1324 + $0x4] sm:$0xf] %vm713, %v1261
      %1327 = vst.msk [vmem:[%s1324 + $0x8] sm:$0xf] %vm713, %v1262
      %1328 = vst.msk [vmem:[%s1324 + $0xc] sm:$0xf] %vm713, %v1263
      %1329 = vst.msk [vmem:[%s1324 + $0x10] sm:$0xf] %vm713, %v1264
      %1330 = vst.msk [vmem:[%s1324 + $0x14] sm:$0xf] %vm713, %v1265
      %1331 = vst.msk [vmem:[%s1324 + $0x18] sm:$0xf] %vm713, %v1266
      %1332 = vst.msk [vmem:[%s1324 + $0x1c] sm:$0xf] %vm713, %v1267
      %1333 = vst.msk [vmem:[%s1324 + $0x20] sm:$0xf] %vm713, %v1268
      %1334 = vst.msk [vmem:[%s1324 + $0x24] sm:$0xf] %vm713, %v1269
      %1335 = vst.msk [vmem:[%s1324 + $0x28] sm:$0xf] %vm713, %v1270
      %1336 = vst.msk [vmem:[%s1324 + $0x2c] sm:$0xf] %vm713, %v1271
      %1337 = vst.msk [vmem:[%s1324 + $0x30] sm:$0xf] %vm713, %v1272
      %1338 = vst.msk [vmem:[%s1324 + $0x34] sm:$0xf] %vm713, %v1273
      %1339 = vst.msk [vmem:[%s1324 + $0x38] sm:$0xf] %vm713, %v1274
      %1340 = vst.msk [vmem:[%s1324 + $0x3c] sm:$0xf] %vm713, %v1275
      %1341 = vst.msk [vmem:[%s1324 + $0x40] sm:$0xf] %vm713, %v1276
      %1342 = vst.msk [vmem:[%s1324 + $0x44] sm:$0xf] %vm713, %v1277
      %1343 = vst.msk [vmem:[%s1324 + $0x48] sm:$0xf] %vm713, %v1278
      %1344 = vst.msk [vmem:[%s1324 + $0x4c] sm:$0xf] %vm713, %v1279
      %1345 = vst.msk [vmem:[%s1324 + $0x50] sm:$0xf] %vm713, %v1280
      %1346 = vst.msk [vmem:[%s1324 + $0x54] sm:$0xf] %vm713, %v1281
      %1347 = vst.msk [vmem:[%s1324 + $0x58] sm:$0xf] %vm713, %v1282
      %1348 = vst.msk [vmem:[%s1324 + $0x5c] sm:$0xf] %vm713, %v1283
      %1349 = vst.msk [vmem:[%s1324 + $0x60] sm:$0xf] %vm713, %v1284
      %1350 = vst.msk [vmem:[%s1324 + $0x64] sm:$0xf] %vm713, %v1285
      %1351 = vst.msk [vmem:[%s1324 + $0x68] sm:$0xf] %vm713, %v1286
      %1352 = vst.msk [vmem:[%s1324 + $0x6c] sm:$0xf] %vm713, %v1287
      %1353 = vst.msk [vmem:[%s1324 + $0x70] sm:$0xf] %vm713, %v1288
      %1354 = vst.msk [vmem:[%s1324 + $0x74] sm:$0xf] %vm713, %v1289
      %1355 = vst.msk [vmem:[%s1324 + $0x78] sm:$0xf] %vm713, %v1290
      %1356 = vst.msk [vmem:[%s1324 + $0x7c] sm:$0xf] %vm713, %v1291
      %s1357 = smul.u32 32, %s22
      %p1358 = scmp.lt.s32.totalorder %s21, 1
      %s1359 = scalar_select %p1358, %s21, 1
      %p1360 = scmp.lt.s32.totalorder %s1357, 31
      %s1361 = scalar_select %p1360, %s1357, 31
      %s1362 = smul.addr %s1359, 64
      %s1363 = sadd.s32 %s1361, %s1362
      %s1364 = smul.addr %s1363, 4
      %s1365 = scalar_lea.vmem %s3, %s1364
      %s1366 = smul.u32 32, %s22
      %p1367 = scmp.lt.s32.totalorder %s21, 1
      %s1368 = scalar_select %p1367, %s21, 1
      %p1369 = scmp.lt.s32.totalorder %s1366, 31
      %s1370 = scalar_select %p1369, %s1366, 31
      %s1371 = smul.addr %s1368, 64
      %s1372 = sadd.s32 %s1370, %s1371
      %s1373 = smul.addr %s1372, 4
      %s1374 = scalar_lea.vmem %s4, %s1373
      %s1375 = smul.u32 32, %s22
      %p1376 = scmp.lt.s32.totalorder %s21, 1
      %s1377 = scalar_select %p1376, %s21, 1
      %p1378 = scmp.lt.s32.totalorder %s1375, 31
      %s1379 = scalar_select %p1378, %s1375, 31
      %s1380 = smul.addr %s1377, 64
      %s1381 = sadd.s32 %s1379, %s1380
      %s1382 = smul.addr %s1381, 4
      %s1383 = scalar_lea.vmem %s5, %s1382
      // Predicated region
      $region33: #{tpu_custom_call.1} parent=31 // pred_check
        %p1384 = pneg %p119
      $region34: #{tpu_custom_call.1} parent=31 // pred_check_branch
        %1386 = sbr.rel (%p1384) target = $region36
      $region35: #{tpu_custom_call.1} parent=31 // pred_region
        %s1387 = smul.u32 32, %s22
      $region36: #{tpu_custom_call.1} parent=31 // pred_fallthru
        _
      // Predicated region
      $region37: #{tpu_custom_call.1} parent=31 // pred_check
        %p1388 = pneg %p147
      $region38: #{tpu_custom_call.1} parent=31 // pred_check_branch
        %1390 = sbr.rel (%p1388) target = $region40
      $region39: #{tpu_custom_call.1} parent=31 // pred_region
        %s1391 = smul.u32 32, %s22
      $region40: #{tpu_custom_call.1} parent=31 // pred_fallthru
        _
      // Predicated region
      $region41: #{tpu_custom_call.1} parent=31 // pred_check
        %p1392 = pneg %p175
      $region42: #{tpu_custom_call.1} parent=31 // pred_check_branch
        %1394 = sbr.rel (%p1392) target = $region44
      $region43: #{tpu_custom_call.1} parent=31 // pred_region
        %s1395 = smul.u32 32, %s22
      $region44: #{tpu_custom_call.1} parent=31 // pred_fallthru
        _
    $region32: #{tpu_custom_call.1} parent=5 // pred_fallthru
      _
    %p1396 = scmp.le.s32.totalorder 2, %s12
    // Predicated region
    $region45: #{tpu_custom_call.1} parent=5 // pred_check
      %p1397 = pneg %p1396
    $region46: #{tpu_custom_call.1} parent=5 // pred_check_branch
      %1399 = sbr.rel (%p1397) target = $region48
    $region47: #{tpu_custom_call.1} parent=5 // pred_region
      %s1400 = ssub.s32 %s12, 2
      // Predicated region
      $region49: #{tpu_custom_call.1} parent=47 // pred_check
        %p1401 = pneg %p125
      $region50: #{tpu_custom_call.1} parent=47 // pred_check_branch
        %1403 = sbr.rel (%p1401) target = $region52
      $region51: #{tpu_custom_call.1} parent=47 // pred_region
        %s1404 = smul.u32 32, %s24
        %p1405 = scmp.lt.s32.totalorder %s23, 1
        %s1406 = scalar_select %p1405, %s23, 1
        %p1407 = scmp.lt.s32.totalorder %s1404, 31
        %s1408 = scalar_select %p1407, %s1404, 31
        %s1409 = smul.addr %s1406, 64
        %s1410 = sadd.s32 %s1408, %s1409
        %s1411 = smul.addr %s1410, 4
        %s1412 = scalar_lea.vmem %s3, %s1411
      $region52: #{tpu_custom_call.1} parent=47 // pred_fallthru
        _
      // Predicated region
      $region53: #{tpu_custom_call.1} parent=47 // pred_check
        %p1413 = pneg %p153
      $region54: #{tpu_custom_call.1} parent=47 // pred_check_branch
        %1415 = sbr.rel (%p1413) target = $region56
      $region55: #{tpu_custom_call.1} parent=47 // pred_region
        %s1416 = smul.u32 32, %s24
        %p1417 = scmp.lt.s32.totalorder %s23, 1
        %s1418 = scalar_select %p1417, %s23, 1
        %p1419 = scmp.lt.s32.totalorder %s1416, 31
        %s1420 = scalar_select %p1419, %s1416, 31
        %s1421 = smul.addr %s1418, 64
        %s1422 = sadd.s32 %s1420, %s1421
        %s1423 = smul.addr %s1422, 4
        %s1424 = scalar_lea.vmem %s4, %s1423
      $region56: #{tpu_custom_call.1} parent=47 // pred_fallthru
        _
      // Predicated region
      $region57: #{tpu_custom_call.1} parent=47 // pred_check
        %p1425 = pneg %p181
      $region58: #{tpu_custom_call.1} parent=47 // pred_check_branch
        %1427 = sbr.rel (%p1425) target = $region60
      $region59: #{tpu_custom_call.1} parent=47 // pred_region
        %s1428 = smul.u32 32, %s24
        %p1429 = scmp.lt.s32.totalorder %s23, 1
        %s1430 = scalar_select %p1429, %s23, 1
        %p1431 = scmp.lt.s32.totalorder %s1428, 31
        %s1432 = scalar_select %p1431, %s1428, 31
        %s1433 = smul.addr %s1430, 64
        %s1434 = sadd.s32 %s1432, %s1433
        %s1435 = smul.addr %s1434, 4
        %s1436 = scalar_lea.vmem %s5, %s1435
      $region60: #{tpu_custom_call.1} parent=47 // pred_fallthru
        _
    $region48: #{tpu_custom_call.1} parent=5 // pred_fallthru
      _
  $region6: #{tpu_custom_call.1} parent=0 // loop_footer
    %s16 = sadd.s32 1, %s12
  $region7: #{tpu_custom_call.1} parent=0 // loop_footer_branch
    %11 = sbr.rel target = $region3
  $region8: #{tpu_custom_call.1} parent=0 // loop_exit
    _

</llo_original>
